<compile_context>
chip_gen: v7x
topology: tpu7x:2x2x1
jax: 0.10.0
libtpu: 0.0.40
codegen_flags: <defaults>
</compile_context>

<pallas_src>
import functools

import numpy as np
import jax
import jax.numpy as jnp
from jax.experimental import pallas as pl
from jax.experimental.pallas import tpu as pltpu

EMBED = 128          # module: 768
NEG_SLOPE = 0.2      # GATConv default negative_slope
BN_EPS = 1e-5        # BatchNorm1d default eps
IGNORE = -100        # CrossEntropyLoss ignore_index
CLASS_PAD = 128      # lane-dense padded class axis


# ----------------------------------------------------------------------------- math
def _gat_core(h, att_src, att_dst, bias, adj):
    """Dense-adjacency GATConv aggregation (heads=1) on an already-projected h (f32).

    adj[i, j] = #edges j->i (self-loops included, duplicate edges counted), which
    reproduces PyG's edge-softmax including edge multiplicity.  att_src / att_dst are
    lane-dense (1, D) row vectors; scores/softmax stay in f32.
    """
    # VPU multiply + XLU lane reduce (no h.T transpose, no 1-wide MXU matmuls).
    a_dst = jnp.sum(h * att_dst, axis=-1, keepdims=True)            # (N, 1)
    a_src = jnp.sum(h * att_src, axis=-1, keepdims=True)            # (N, 1)
    logits = a_dst + a_src.T                                        # (N, N): [i,j] = dst_i + src_j
    logits = jnp.where(logits >= 0, logits, NEG_SLOPE * logits)     # leaky_relu
    masked = jnp.where(adj > 0, logits, -1e30)                      # f32 sentinel
    row_max = jnp.max(masked, axis=1, keepdims=True)
    w_exp = adj * jnp.exp(masked - row_max)
    alpha = w_exp / jnp.sum(w_exp, axis=1, keepdims=True)
    return jnp.dot(alpha, h, preferred_element_type=jnp.float32) + bias


def _cross_entropy(logits, onehot, mask):
    """Mean CE over rows where mask == 1 (matches ignore_index + reduction='mean')."""
    m = jnp.max(logits, axis=-1, keepdims=True)
    lse = m + jnp.log(jnp.sum(jnp.exp(logits - m), axis=-1, keepdims=True))
    logp_t = jnp.sum(onehot * (logits - lse), axis=-1, keepdims=True)   # (N, 1)
    return (jnp.sum(mask * (-logp_t), axis=0, keepdims=True)
            / jnp.sum(mask, axis=0, keepdims=True))                     # (1, 1)


def _head_and_metrics(fused, adj, tgt, d_b,
                      g1_as, g1_ad, g1_b, g2_wh, g2_as, g2_ad, g2_b, p_w, p_b):
    """Everything after the fused xn @ W_big matmul (shared by kernel and reference)."""
    e = g2_wh.shape[0]

    direct = fused[:, 2 * e:] + d_b                                       # (N, Cp)
    h1 = _gat_core(fused[:, :e], g1_as, g1_ad, g1_b, adj)                 # (N, E)
    h2 = (jnp.dot(h1.astype(jnp.bfloat16), g2_wh,
                  preferred_element_type=jnp.float32) + fused[:, e:2 * e])
    out = _gat_core(h2, g2_as, g2_ad, g2_b, adj)                          # (N, E)
    pooler = jnp.dot(out, p_w, preferred_element_type=jnp.float32) + p_b  # (N, Cp)

    n, cp = pooler.shape
    mask = (tgt >= 0).astype(jnp.float32)                                 # (N, 1)
    class_ids = jax.lax.broadcasted_iota(jnp.int32, (n, cp), 1)
    onehot = (class_ids == tgt).astype(jnp.float32)
    loss = _cross_entropy(pooler, onehot, mask) + _cross_entropy(direct, onehot, mask)

    # argmax via "first index achieving the row max" (matches torch.argmax semantics);
    # padded class columns sit at -1e30 (pad bias) and can never win.
    row_max = jnp.max(pooler, axis=-1, keepdims=True)
    pred = jnp.min(jnp.where(pooler == row_max, class_ids, cp), axis=-1, keepdims=True)
    correct = (pred == tgt).astype(jnp.float32) * mask
    acc = jnp.sum(correct, axis=0, keepdims=True) / jnp.sum(mask, axis=0, keepdims=True)
    return out, pooler, loss, acc


# --------------------------------------------------------------------------- kernel
def gnn_kernel(x_ref, bn_g_ref, bn_b_ref, wbig_ref,              # streamed over K blocks
               adj_ref, tgt_ref, db_ref,                         # resident
               g1s_ref, g1d_ref, g1b_ref,
               g2wh_ref, g2s_ref, g2d_ref, g2b_ref,
               pw_ref, pb_ref,
               out_ref, pool_ref, stats_ref,
               acc_ref):
    k = pl.program_id(0)

    @pl.when(k == 0)
    def _init():
        acc_ref[...] = jnp.zeros_like(acc_ref)

    # BatchNorm1d (training-mode batch stats) on this feature block.  BN is column-wise,
    # so per-K-block normalization is exact.  One-pass variance, clamped to >= 0.
    xb = x_ref[...]
    mean = jnp.mean(xb, axis=0, keepdims=True)
    var = jnp.maximum(jnp.mean(xb * xb, axis=0, keepdims=True) - mean * mean, 0.0)
    xn = (xb - mean) * jax.lax.rsqrt(var + BN_EPS) * bn_g_ref[...] + bn_b_ref[...]

    # Fused projection: [g1_w | g2_w_x | d_w_pad] in one wide MXU pass, f32 accumulate.
    acc_ref[...] += jnp.dot(xn.astype(jnp.bfloat16), wbig_ref[...],
                            preferred_element_type=jnp.float32)

    @pl.when(k == pl.num_programs(0) - 1)
    def _finalize():
        out, pooler, loss, acc = _head_and_metrics(
            acc_ref[...], adj_ref[...], tgt_ref[...], db_ref[...],
            g1s_ref[...], g1d_ref[...], g1b_ref[...],
            g2wh_ref[...], g2s_ref[...], g2d_ref[...], g2b_ref[...],
            pw_ref[...], pb_ref[...])

        out_ref[...] = out                       # (N, E)   lane-dense
        pool_ref[...] = pooler                   # (N, Cp)  lane-dense (padded classes)
        lane = jax.lax.broadcasted_iota(jnp.int32, stats_ref.shape, 1)
        stats_ref[...] = jnp.where(lane == 0, loss, jnp.where(lane == 1, acc, 0.0))


# ----------------------------------------------------------------- one-time weight prep
def prepare_params(params):
    """Hoisted out of the hot path: bf16 casts, g2_w split, W_big fusion, class padding."""
    e = params["g1_w"].shape[1]
    c = params["d_w"].shape[1]
    cp = CLASS_PAD
    bf16 = jnp.bfloat16

    def pad_cols(w, width, fill=0.0):
        pad = jnp.full((w.shape[0], width - w.shape[1]), fill, w.dtype)
        return jnp.concatenate([w, pad], axis=1)

    d_w_pad = pad_cols(params["d_w"], cp)                              # (3E, Cp), zero pad
    w_big = jnp.concatenate(
        [params["g1_w"], params["g2_w"][e:], d_w_pad], axis=1).astype(bf16)  # (3E, 2E+Cp)

    return dict(
        classes=c,
        bn_g=params["bn_g"], bn_b=params["bn_b"],
        w_big=w_big,
        d_b=pad_cols(params["d_b"], cp, -1e30),                        # -1e30 pad => dead logits
        g1_as=params["g1_as"], g1_ad=params["g1_ad"], g1_b=params["g1_b"],
        g2_wh=params["g2_w"][:e].astype(bf16),                         # (E, E)
        g2_as=params["g2_as"], g2_ad=params["g2_ad"], g2_b=params["g2_b"],
        p_w=pad_cols(params["p_w"], cp),
        p_b=pad_cols(params["p_b"], cp, -1e30),
    )


# -------------------------------------------------------------------------- wrapper
def gnn_forward(x, adj, target, prep, *, tk=128):
    n, f = x.shape                         # f = 3E
    e = prep["g2_wh"].shape[0]
    cp = prep["p_w"].shape[1]
    c = prep["classes"]
    wide = 2 * e + cp
    assert f % tk == 0
    ksteps = f // tk

    inputs = (x, prep["bn_g"], prep["bn_b"], prep["w_big"],
              adj, target, prep["d_b"],
              prep["g1_as"], prep["g1_ad"], prep["g1_b"],
              prep["g2_wh"], prep["g2_as"], prep["g2_ad"], prep["g2_b"],
              prep["p_w"], prep["p_b"])

    const = lambda k: (0, 0)               # resident operands: DMA once, reuse each step
    in_specs = [
        pl.BlockSpec((n, tk), lambda k: (0, k)),        # x           (streamed over K)
        pl.BlockSpec((1, tk), lambda k: (0, k)),        # bn_g
        pl.BlockSpec((1, tk), lambda k: (0, k)),        # bn_b
        pl.BlockSpec((tk, wide), lambda k: (k, 0)),     # W_big bf16  (streamed over K)
        pl.BlockSpec((n, n), const),                    # adj
        pl.BlockSpec((n, 1), const),                    # target
        pl.BlockSpec((1, cp), const),                   # d_b (padded)
        pl.BlockSpec((1, e), const),                    # g1_as
        pl.BlockSpec((1, e), const),                    # g1_ad
        pl.BlockSpec((1, e), const),                    # g1_b
        pl.BlockSpec((e, e), const),                    # g2_wh bf16
        pl.BlockSpec((1, e), const),                    # g2_as
        pl.BlockSpec((1, e), const),                    # g2_ad
        pl.BlockSpec((1, e), const),                    # g2_b
        pl.BlockSpec((e, cp), const),                   # p_w (padded)
        pl.BlockSpec((1, cp), const),                   # p_b (padded)
    ]
    out_specs = (pl.BlockSpec((n, e), const),
                 pl.BlockSpec((n, cp), const),
                 pl.BlockSpec((1, 128), const))
    out_shapes = (jax.ShapeDtypeStruct((n, e), jnp.float32),      # gcn2 output
                  jax.ShapeDtypeStruct((n, cp), jnp.float32),     # pooler logits (padded)
                  jax.ShapeDtypeStruct((1, 128), jnp.float32))    # [loss, acc, 0...]

    def nbytes(a):
        return int(np.prod(a.shape)) * jnp.dtype(a.dtype).itemsize

    # VMEM footprint: 2x-buffered streamed blocks + resident weights + outputs + scratch.
    block_bytes = n * tk * 4 + 2 * tk * 4 + tk * wide * 2
    resident_bytes = sum(nbytes(a) for a in inputs[4:])
    out_bytes = (n * e + n * cp + 128) * 4
    scratch_bytes = n * wide * 4
    need = 2 * block_bytes + resident_bytes + 2 * out_bytes + scratch_bytes
    vmem_limit = int(min(48 << 20, max(8 << 20, 2 * need)))

    cost = pl.CostEstimate(
        flops=2 * n * f * wide + 4 * n * n * e + 2 * n * e * e + 2 * n * e * cp,
        transcendentals=2 * n * n + 2 * n * cp + 2 * n,
        bytes_accessed=sum(nbytes(a) for a in inputs) + out_bytes)

    out, pooler, stats = pl.pallas_call(
        gnn_kernel,
        out_shape=out_shapes,
        grid_spec=pltpu.PrefetchScalarGridSpec(
            num_scalar_prefetch=0,
            grid=(ksteps,),
            in_specs=in_specs,
            out_specs=out_specs,
            scratch_shapes=[pltpu.VMEM((n, wide), jnp.float32)]),
        compiler_params=pltpu.CompilerParams(
            dimension_semantics=("arbitrary",),
            vmem_limit_bytes=vmem_limit),
        cost_estimate=cost,
    )(*inputs)
    return out, pooler[:, :c], stats[0, 0], stats[0, 1]


# -------------------------------------------------------- synthetic graph + params
def build_graph(key, num_subs=4, num_rels=6, num_objs=6, classes=3, embed=EMBED):
    n = num_subs + num_rels + num_objs
    k1, k2 = jax.random.split(key)
    embs = np.asarray(jax.random.normal(k1, (n, embed), dtype=jnp.float32))

    # Graph.x: block-placed embeddings [sub | rel | obj] -> (N, 3*embed)
    x = np.zeros((n, 3 * embed), np.float32)
    for i in range(n):
        blk = 0 if i < num_subs else (1 if i < num_subs + num_rels else 2)
        x[i, blk * embed:(blk + 1) * embed] = embs[i]

    # Graph.edge_index: (sub -> rel), (rel -> obj)
    edges = []
    for t in range(num_rels):
        sub = t % num_subs
        rel = num_subs + t
        obj = num_subs + num_rels + (t % num_objs)
        edges.append((sub, rel))
        edges.append((rel, obj))
    edges.append(edges[0])  # duplicate edge to exercise edge-multiplicity handling
    edge_index = np.array(edges, np.int64).T              # (2, E): row0=src, row1=dst

    # dense adjacency counts + self-loops (GATConv: remove_self_loops + add_self_loops)
    adj = np.zeros((n, n), np.float32)
    for s, dd in zip(edge_index[0], edge_index[1]):
        if s != dd:
            adj[dd, s] += 1.0
    adj += np.eye(n, dtype=np.float32)

    # Graph.group_index: subjects get a class id, rel/obj nodes are ignored
    tgt = np.full((n, 1), IGNORE, np.int32)
    tgt[:num_subs, 0] = np.asarray(jax.random.randint(k2, (num_subs,), 0, classes))
    return jnp.asarray(x), jnp.asarray(adj), jnp.asarray(tgt)


def init_params(key, embed=EMBED, classes=3):
    f, d, f2 = 3 * embed, embed, 4 * embed
    keys = jax.random.split(key, 10)

    def u(k, shape, fan_in):
        b = 1.0 / np.sqrt(fan_in)
        return jax.random.uniform(k, shape, jnp.float32, -b, b)

    # attention vectors stored lane-dense as (1, d)
    return dict(
        bn_g=jnp.ones((1, f), jnp.float32), bn_b=jnp.zeros((1, f), jnp.float32),
        d_w=u(keys[0], (f, classes), f), d_b=u(keys[1], (1, classes), f),
        g1_w=u(keys[2], (f, d), f), g1_as=u(keys[3], (1, d), d),
        g1_ad=u(keys[4], (1, d), d), g1_b=jnp.zeros((1, d), jnp.float32),
        g2_w=u(keys[5], (f2, d), f2), g2_as=u(keys[6], (1, d), d),
        g2_ad=u(keys[7], (1, d), d), g2_b=jnp.zeros((1, d), jnp.float32),
        p_w=u(keys[8], (d, classes), d), p_b=u(keys[9], (1, classes), d),
    )


# ------------------------------------------------------------- pure-JAX reference
def reference_forward(x, adj, tgt, prep):
    e = prep["g2_wh"].shape[0]
    c = prep["classes"]
    mean = jnp.mean(x, axis=0, keepdims=True)
    var = jnp.maximum(jnp.mean(x * x, axis=0, keepdims=True) - mean * mean, 0.0)
    xn = (x - mean) * jax.lax.rsqrt(var + BN_EPS) * prep["bn_g"] + prep["bn_b"]
    fused = jnp.dot(xn.astype(jnp.bfloat16), prep["w_big"],
                    preferred_element_type=jnp.float32)
    out, pooler, loss, acc = _head_and_metrics(
        fused, adj, tgt, prep["d_b"],
        prep["g1_as"], prep["g1_ad"], prep["g1_b"],
        prep["g2_wh"], prep["g2_as"], prep["g2_ad"], prep["g2_b"],
        prep["p_w"], prep["p_b"])
    return out, pooler[:, :c], loss[0, 0], acc[0, 0]


if __name__ == "__main__":
    key = jax.random.PRNGKey(0)
    kg, kp = jax.random.split(key)
    classes = 3
    x, adj, tgt = build_graph(kg, classes=classes)
    params = init_params(kp, classes=classes)
    prep = prepare_params(params)          # one-time: bf16 cast, split, fuse, pad

    out, pooler, loss, acc = jax.block_until_ready(gnn_forward(x, adj, tgt, prep))

    ro, rp, rl, ra = reference_forward(x, adj, tgt, prep)
    np.testing.assert_allclose(np.asarray(out), np.asarray(ro), rtol=2e-2, atol=2e-2)
    np.testing.assert_allclose(np.asarray(pooler), np.asarray(rp), rtol=2e-2, atol=2e-2)
    np.testing.assert_allclose(float(loss), float(rl), rtol=2e-2, atol=2e-2)
    np.testing.assert_allclose(float(acc), float(ra), rtol=1e-6, atol=1e-6)

    print("KERNEL_OK")
</pallas_src>

<mosaic_0001>
module attributes {stable_mosaic.version = 11 : i64} {
  func.func @gnn_kernel(%arg0: i32, %arg1: memref<16x128xf32, #tpu.memory_space<vmem>>, %arg2: memref<1x128xf32, #tpu.memory_space<vmem>>, %arg3: memref<1x128xf32, #tpu.memory_space<vmem>>, %arg4: memref<128x384xbf16, #tpu.memory_space<vmem>>, %arg5: memref<16x16xf32, #tpu.memory_space<vmem>>, %arg6: memref<16x1xi32, #tpu.memory_space<vmem>>, %arg7: memref<1x128xf32, #tpu.memory_space<vmem>>, %arg8: memref<1x128xf32, #tpu.memory_space<vmem>>, %arg9: memref<1x128xf32, #tpu.memory_space<vmem>>, %arg10: memref<1x128xf32, #tpu.memory_space<vmem>>, %arg11: memref<128x128xbf16, #tpu.memory_space<vmem>>, %arg12: memref<1x128xf32, #tpu.memory_space<vmem>>, %arg13: memref<1x128xf32, #tpu.memory_space<vmem>>, %arg14: memref<1x128xf32, #tpu.memory_space<vmem>>, %arg15: memref<128x128xf32, #tpu.memory_space<vmem>>, %arg16: memref<1x128xf32, #tpu.memory_space<vmem>>, %arg17: memref<16x128xf32, #tpu.memory_space<vmem>>, %arg18: memref<16x128xf32, #tpu.memory_space<vmem>>, %arg19: memref<1x128xf32, #tpu.memory_space<vmem>>, %arg20: memref<16x384xf32, #tpu.memory_space<vmem>>) attributes {dimension_semantics = [#tpu.dimension_semantics<arbitrary>], iteration_bounds = array<i64: 3>, scalar_prefetch = 0 : i64, scratch_operands = 1 : i64, tpu.core_type = #tpu.core_type<tc>, window_params = [{transform_indices = @transform_0, window_bounds = array<i64: 16, 128>}, {transform_indices = @transform_1, window_bounds = array<i64: 1, 128>}, {transform_indices = @transform_2, window_bounds = array<i64: 1, 128>}, {transform_indices = @transform_3, window_bounds = array<i64: 128, 384>}, {pipeline_mode = #tpu.pipeline_mode<synchronous>, transform_indices = @transform_4, window_bounds = array<i64: 16, 16>}, {pipeline_mode = #tpu.pipeline_mode<synchronous>, transform_indices = @transform_5, window_bounds = array<i64: 16, 1>}, {pipeline_mode = #tpu.pipeline_mode<synchronous>, transform_indices = @transform_6, window_bounds = array<i64: 1, 128>}, {pipeline_mode = #tpu.pipeline_mode<synchronous>, transform_indices = @transform_7, window_bounds = array<i64: 1, 128>}, {pipeline_mode = #tpu.pipeline_mode<synchronous>, transform_indices = @transform_8, window_bounds = array<i64: 1, 128>}, {pipeline_mode = #tpu.pipeline_mode<synchronous>, transform_indices = @transform_9, window_bounds = array<i64: 1, 128>}, {pipeline_mode = #tpu.pipeline_mode<synchronous>, transform_indices = @transform_10, window_bounds = array<i64: 128, 128>}, {pipeline_mode = #tpu.pipeline_mode<synchronous>, transform_indices = @transform_11, window_bounds = array<i64: 1, 128>}, {pipeline_mode = #tpu.pipeline_mode<synchronous>, transform_indices = @transform_12, window_bounds = array<i64: 1, 128>}, {pipeline_mode = #tpu.pipeline_mode<synchronous>, transform_indices = @transform_13, window_bounds = array<i64: 1, 128>}, {pipeline_mode = #tpu.pipeline_mode<synchronous>, transform_indices = @transform_14, window_bounds = array<i64: 128, 128>}, {pipeline_mode = #tpu.pipeline_mode<synchronous>, transform_indices = @transform_15, window_bounds = array<i64: 1, 128>}, {pipeline_mode = #tpu.pipeline_mode<synchronous>, transform_indices = @transform_16, window_bounds = array<i64: 16, 128>}, {pipeline_mode = #tpu.pipeline_mode<synchronous>, transform_indices = @transform_17, window_bounds = array<i64: 16, 128>}, {pipeline_mode = #tpu.pipeline_mode<synchronous>, transform_indices = @transform_18, window_bounds = array<i64: 1, 128>}]} {
    %c0_i32 = arith.constant 0 : i32
    %0 = arith.cmpi eq, %arg0, %c0_i32 : i32
    %1 = arith.extui %0 : i1 to i32
    %c0_i32_0 = arith.constant 0 : i32
    %2 = arith.cmpi ne, %1, %c0_i32_0 : i32
    scf.if %2 {
      %cst_19 = arith.constant 0.000000e+00 : f32
      %39 = vector.broadcast %cst_19 : f32 to vector<16x384xf32>
      %c0_20 = arith.constant 0 : index
      %c0_21 = arith.constant 0 : index
      %40 = vector.load %arg20[%c0_20, %c0_21] : memref<16x384xf32, #tpu.memory_space<vmem>>, vector<16x384xf32>
      tpu.vector_store %arg20[%c0_20, %c0_21], %39 {strides = array<i32>} : memref<16x384xf32, #tpu.memory_space<vmem>>, vector<16x384xf32>,
    } else {
    }
    %c0 = arith.constant 0 : index
    %c0_1 = arith.constant 0 : index
    %3 = vector.load %arg1[%c0, %c0_1] : memref<16x128xf32, #tpu.memory_space<vmem>>, vector<16x128xf32>
    %cst = arith.constant dense<0.000000e+00> : vector<128xf32>
    %4 = vector.multi_reduction <add>, %3, %cst [0] : vector<16x128xf32> to vector<128xf32>
    %5 = vector.shape_cast %4 : vector<128xf32> to vector<1x128xf32>
    %cst_2 = arith.constant 1.600000e+01 : f32
    %6 = vector.broadcast %cst_2 : f32 to vector<1x128xf32>
    %7 = arith.divf %5, %6 : vector<1x128xf32>
    %8 = arith.mulf %3, %3 : vector<16x128xf32>
    %cst_3 = arith.constant dense<0.000000e+00> : vector<128xf32>
    %9 = vector.multi_reduction <add>, %8, %cst_3 [0] : vector<16x128xf32> to vector<128xf32>
    %10 = vector.shape_cast %9 : vector<128xf32> to vector<1x128xf32>
    %cst_4 = arith.constant 1.600000e+01 : f32
    %11 = vector.broadcast %cst_4 : f32 to vector<1x128xf32>
    %12 = arith.divf %10, %11 : vector<1x128xf32>
    %13 = arith.mulf %7, %7 : vector<1x128xf32>
    %14 = arith.subf %12, %13 : vector<1x128xf32>
    %cst_5 = arith.constant 0.000000e+00 : f32
    %15 = vector.broadcast %cst_5 : f32 to vector<1x128xf32>
    %16 = arith.maximumf %14, %15 : vector<1x128xf32>
    %17 = vector.broadcast %7 : vector<1x128xf32> to vector<16x128xf32>
    %18 = arith.subf %3, %17 : vector<16x128xf32>
    %cst_6 = arith.constant 9.99999974E-6 : f32
    %19 = vector.broadcast %cst_6 : f32 to vector<1x128xf32>
    %20 = arith.addf %16, %19 : vector<1x128xf32>
    %21 = math.rsqrt %20 : vector<1x128xf32>
    %22 = vector.broadcast %21 : vector<1x128xf32> to vector<16x128xf32>
    %23 = arith.mulf %18, %22 : vector<16x128xf32>
    %c0_7 = arith.constant 0 : index
    %c0_8 = arith.constant 0 : index
    %24 = vector.load %arg2[%c0_7, %c0_8] : memref<1x128xf32, #tpu.memory_space<vmem>>, vector<1x128xf32>
    %25 = vector.broadcast %24 : vector<1x128xf32> to vector<16x128xf32>
    %26 = arith.mulf %23, %25 : vector<16x128xf32>
    %c0_9 = arith.constant 0 : index
    %c0_10 = arith.constant 0 : index
    %27 = vector.load %arg3[%c0_9, %c0_10] : memref<1x128xf32, #tpu.memory_space<vmem>>, vector<1x128xf32>
    %28 = vector.broadcast %27 : vector<1x128xf32> to vector<16x128xf32>
    %29 = arith.addf %26, %28 : vector<16x128xf32>
    %c0_11 = arith.constant 0 : index
    %c0_12 = arith.constant 0 : index
    %30 = vector.load %arg20[%c0_11, %c0_12] : memref<16x384xf32, #tpu.memory_space<vmem>>, vector<16x384xf32>
    %31 = arith.truncf %29 : vector<16x128xf32> to vector<16x128xbf16>
    %c0_13 = arith.constant 0 : index
    %c0_14 = arith.constant 0 : index
    %32 = vector.load %arg4[%c0_13, %c0_14] : memref<128x384xbf16, #tpu.memory_space<vmem>>, vector<128x384xbf16>
    %cst_15 = arith.constant dense<0.000000e+00> : vector<16x384xf32>
    %33 = tpu.matmul %31, %32, %cst_15 {dimension_numbers = #tpu.dot_dimension_numbers<[1], [0], [0], [1], [0, 0, 1, 1], [], []>} : vector<16x128xbf16>, vector<128x384xbf16>, vector<16x384xf32> -> vector<16x384xf32>
    %34 = arith.addf %30, %33 : vector<16x384xf32>
    %c0_16 = arith.constant 0 : index
    %c0_17 = arith.constant 0 : index
    %35 = vector.load %arg20[%c0_16, %c0_17] : memref<16x384xf32, #tpu.memory_space<vmem>>, vector<16x384xf32>
    tpu.vector_store %arg20[%c0_16, %c0_17], %34 {strides = array<i32>} : memref<16x384xf32, #tpu.memory_space<vmem>>, vector<16x384xf32>,
    %c2_i32 = arith.constant 2 : i32
    %36 = arith.cmpi eq, %arg0, %c2_i32 : i32
    %37 = arith.extui %36 : i1 to i32
    %c0_i32_18 = arith.constant 0 : i32
    %38 = arith.cmpi ne, %37, %c0_i32_18 : i32
    scf.if %38 {
      %c0_19 = arith.constant 0 : index
      %c0_20 = arith.constant 0 : index
      %39 = vector.load %arg20[%c0_19, %c0_20] : memref<16x384xf32, #tpu.memory_space<vmem>>, vector<16x384xf32>
      %c0_21 = arith.constant 0 : index
      %c0_22 = arith.constant 0 : index
      %40 = vector.load %arg5[%c0_21, %c0_22] : memref<16x16xf32, #tpu.memory_space<vmem>>, vector<16x16xf32>
      %c0_23 = arith.constant 0 : index
      %c0_24 = arith.constant 0 : index
      %41 = vector.load %arg6[%c0_23, %c0_24] : memref<16x1xi32, #tpu.memory_space<vmem>>, vector<16x1xi32>
      %c0_25 = arith.constant 0 : index
      %c0_26 = arith.constant 0 : index
      %42 = vector.load %arg7[%c0_25, %c0_26] : memref<1x128xf32, #tpu.memory_space<vmem>>, vector<1x128xf32>
      %c0_27 = arith.constant 0 : index
      %c0_28 = arith.constant 0 : index
      %43 = vector.load %arg8[%c0_27, %c0_28] : memref<1x128xf32, #tpu.memory_space<vmem>>, vector<1x128xf32>
      %c0_29 = arith.constant 0 : index
      %c0_30 = arith.constant 0 : index
      %44 = vector.load %arg9[%c0_29, %c0_30] : memref<1x128xf32, #tpu.memory_space<vmem>>, vector<1x128xf32>
      %c0_31 = arith.constant 0 : index
      %c0_32 = arith.constant 0 : index
      %45 = vector.load %arg10[%c0_31, %c0_32] : memref<1x128xf32, #tpu.memory_space<vmem>>, vector<1x128xf32>
      %c0_33 = arith.constant 0 : index
      %c0_34 = arith.constant 0 : index
      %46 = vector.load %arg11[%c0_33, %c0_34] : memref<128x128xbf16, #tpu.memory_space<vmem>>, vector<128x128xbf16>
      %c0_35 = arith.constant 0 : index
      %c0_36 = arith.constant 0 : index
      %47 = vector.load %arg12[%c0_35, %c0_36] : memref<1x128xf32, #tpu.memory_space<vmem>>, vector<1x128xf32>
      %c0_37 = arith.constant 0 : index
      %c0_38 = arith.constant 0 : index
      %48 = vector.load %arg13[%c0_37, %c0_38] : memref<1x128xf32, #tpu.memory_space<vmem>>, vector<1x128xf32>
      %c0_39 = arith.constant 0 : index
      %c0_40 = arith.constant 0 : index
      %49 = vector.load %arg14[%c0_39, %c0_40] : memref<1x128xf32, #tpu.memory_space<vmem>>, vector<1x128xf32>
      %c0_41 = arith.constant 0 : index
      %c0_42 = arith.constant 0 : index
      %50 = vector.load %arg15[%c0_41, %c0_42] : memref<128x128xf32, #tpu.memory_space<vmem>>, vector<128x128xf32>
      %c0_43 = arith.constant 0 : index
      %c0_44 = arith.constant 0 : index
      %51 = vector.load %arg16[%c0_43, %c0_44] : memref<1x128xf32, #tpu.memory_space<vmem>>, vector<1x128xf32>
      %52 = vector.extract_strided_slice %39 {offsets = [0, 256], sizes = [16, 128], strides = [1, 1]} : vector<16x384xf32> to vector<16x128xf32>
      %53 = vector.broadcast %42 : vector<1x128xf32> to vector<16x128xf32>
      %54 = arith.addf %52, %53 : vector<16x128xf32>
      %55 = vector.extract_strided_slice %39 {offsets = [0, 0], sizes = [16, 128], strides = [1, 1]} : vector<16x384xf32> to vector<16x128xf32>
      %56 = vector.broadcast %44 : vector<1x128xf32> to vector<16x128xf32>
      %57 = arith.mulf %55, %56 : vector<16x128xf32>
      %cst_45 = arith.constant dense<0.000000e+00> : vector<16xf32>
      %58 = vector.multi_reduction <add>, %57, %cst_45 [1] : vector<16x128xf32> to vector<16xf32>
      %59 = vector.shape_cast %58 : vector<16xf32> to vector<16x1xf32>
      %60 = vector.broadcast %43 : vector<1x128xf32> to vector<16x128xf32>
      %61 = arith.mulf %55, %60 : vector<16x128xf32>
      %cst_46 = arith.constant dense<0.000000e+00> : vector<16xf32>
      %62 = vector.multi_reduction <add>, %61, %cst_46 [1] : vector<16x128xf32> to vector<16xf32>
      %63 = vector.shape_cast %62 : vector<16xf32> to vector<16x1xf32>
      %64 = tpu.transpose %63, [1, 0] : vector<16x1xf32> -> vector<1x16xf32>
      %65 = vector.broadcast %59 : vector<16x1xf32> to vector<16x16xf32>
      %66 = vector.broadcast %64 : vector<1x16xf32> to vector<16x16xf32>
      %67 = arith.addf %65, %66 : vector<16x16xf32>
      %cst_47 = arith.constant 0.000000e+00 : f32
      %68 = vector.broadcast %cst_47 : f32 to vector<16x16xf32>
      %69 = arith.cmpf oge, %67, %68 : vector<16x16xf32>
      %cst_48 = arith.constant 2.000000e-01 : f32
      %70 = vector.broadcast %cst_48 : f32 to vector<16x16xf32>
      %71 = arith.mulf %70, %67 : vector<16x16xf32>
      %72 = arith.select %69, %67, %71 : vector<16x16xi1>, vector<16x16xf32>
      %cst_49 = arith.constant 0.000000e+00 : f32
      %73 = vector.broadcast %cst_49 : f32 to vector<16x16xf32>
      %74 = arith.cmpf ogt, %40, %73 : vector<16x16xf32>
      %cst_50 = arith.constant -1.000000e+30 : f32
      %75 = vector.broadcast %cst_50 : f32 to vector<16x16xf32>
      %76 = arith.select %74, %72, %75 : vector<16x16xi1>, vector<16x16xf32>
      %cst_51 = arith.constant dense<0xFF800000> : vector<16xf32>
      %77 = vector.multi_reduction <maximumf>, %76, %cst_51 [1] : vector<16x16xf32> to vector<16xf32>
      %78 = vector.shape_cast %77 : vector<16xf32> to vector<16x1xf32>
      %79 = vector.broadcast %78 : vector<16x1xf32> to vector<16x16xf32>
      %80 = arith.subf %76, %79 : vector<16x16xf32>
      %81 = math.exp %80 : vector<16x16xf32>
      %82 = arith.mulf %40, %81 : vector<16x16xf32>
      %cst_52 = arith.constant dense<0.000000e+00> : vector<16xf32>
      %83 = vector.multi_reduction <add>, %82, %cst_52 [1] : vector<16x16xf32> to vector<16xf32>
      %84 = vector.shape_cast %83 : vector<16xf32> to vector<16x1xf32>
      %85 = vector.broadcast %84 : vector<16x1xf32> to vector<16x16xf32>
      %86 = arith.divf %82, %85 : vector<16x16xf32>
      %cst_53 = arith.constant dense<0.000000e+00> : vector<16x128xf32>
      %87 = tpu.matmul %86, %55, %cst_53 {dimension_numbers = #tpu.dot_dimension_numbers<[1], [0], [0], [1], [0, 0, 1, 1], [], []>} : vector<16x16xf32>, vector<16x128xf32>, vector<16x128xf32> -> vector<16x128xf32>
      %88 = vector.broadcast %45 : vector<1x128xf32> to vector<16x128xf32>
      %89 = arith.addf %87, %88 : vector<16x128xf32>
      %90 = arith.truncf %89 : vector<16x128xf32> to vector<16x128xbf16>
      %cst_54 = arith.constant dense<0.000000e+00> : vector<16x128xf32>
      %91 = tpu.matmul %90, %46, %cst_54 {dimension_numbers = #tpu.dot_dimension_numbers<[1], [0], [0], [1], [0, 0, 1, 1], [], []>} : vector<16x128xbf16>, vector<128x128xbf16>, vector<16x128xf32> -> vector<16x128xf32>
      %92 = vector.extract_strided_slice %39 {offsets = [0, 128], sizes = [16, 128], strides = [1, 1]} : vector<16x384xf32> to vector<16x128xf32>
      %93 = arith.addf %91, %92 : vector<16x128xf32>
      %94 = vector.broadcast %48 : vector<1x128xf32> to vector<16x128xf32>
      %95 = arith.mulf %93, %94 : vector<16x128xf32>
      %cst_55 = arith.constant dense<0.000000e+00> : vector<16xf32>
      %96 = vector.multi_reduction <add>, %95, %cst_55 [1] : vector<16x128xf32> to vector<16xf32>
      %97 = vector.shape_cast %96 : vector<16xf32> to vector<16x1xf32>
      %98 = vector.broadcast %47 : vector<1x128xf32> to vector<16x128xf32>
      %99 = arith.mulf %93, %98 : vector<16x128xf32>
      %cst_56 = arith.constant dense<0.000000e+00> : vector<16xf32>
      %100 = vector.multi_reduction <add>, %99, %cst_56 [1] : vector<16x128xf32> to vector<16xf32>
      %101 = vector.shape_cast %100 : vector<16xf32> to vector<16x1xf32>
      %102 = tpu.transpose %101, [1, 0] : vector<16x1xf32> -> vector<1x16xf32>
      %103 = vector.broadcast %97 : vector<16x1xf32> to vector<16x16xf32>
      %104 = vector.broadcast %102 : vector<1x16xf32> to vector<16x16xf32>
      %105 = arith.addf %103, %104 : vector<16x16xf32>
      %cst_57 = arith.constant 0.000000e+00 : f32
      %106 = vector.broadcast %cst_57 : f32 to vector<16x16xf32>
      %107 = arith.cmpf oge, %105, %106 : vector<16x16xf32>
      %cst_58 = arith.constant 2.000000e-01 : f32
      %108 = vector.broadcast %cst_58 : f32 to vector<16x16xf32>
      %109 = arith.mulf %108, %105 : vector<16x16xf32>
      %110 = arith.select %107, %105, %109 : vector<16x16xi1>, vector<16x16xf32>
      %cst_59 = arith.constant 0.000000e+00 : f32
      %111 = vector.broadcast %cst_59 : f32 to vector<16x16xf32>
      %112 = arith.cmpf ogt, %40, %111 : vector<16x16xf32>
      %cst_60 = arith.constant -1.000000e+30 : f32
      %113 = vector.broadcast %cst_60 : f32 to vector<16x16xf32>
      %114 = arith.select %112, %110, %113 : vector<16x16xi1>, vector<16x16xf32>
      %cst_61 = arith.constant dense<0xFF800000> : vector<16xf32>
      %115 = vector.multi_reduction <maximumf>, %114, %cst_61 [1] : vector<16x16xf32> to vector<16xf32>
      %116 = vector.shape_cast %115 : vector<16xf32> to vector<16x1xf32>
      %117 = vector.broadcast %116 : vector<16x1xf32> to vector<16x16xf32>
      %118 = arith.subf %114, %117 : vector<16x16xf32>
      %119 = math.exp %118 : vector<16x16xf32>
      %120 = arith.mulf %40, %119 : vector<16x16xf32>
      %cst_62 = arith.constant dense<0.000000e+00> : vector<16xf32>
      %121 = vector.multi_reduction <add>, %120, %cst_62 [1] : vector<16x16xf32> to vector<16xf32>
      %122 = vector.shape_cast %121 : vector<16xf32> to vector<16x1xf32>
      %123 = vector.broadcast %122 : vector<16x1xf32> to vector<16x16xf32>
      %124 = arith.divf %120, %123 : vector<16x16xf32>
      %cst_63 = arith.constant dense<0.000000e+00> : vector<16x128xf32>
      %125 = tpu.matmul %124, %93, %cst_63 {dimension_numbers = #tpu.dot_dimension_numbers<[1], [0], [0], [1], [0, 0, 1, 1], [], []>} : vector<16x16xf32>, vector<16x128xf32>, vector<16x128xf32> -> vector<16x128xf32>
      %126 = vector.broadcast %49 : vector<1x128xf32> to vector<16x128xf32>
      %127 = arith.addf %125, %126 : vector<16x128xf32>
      %cst_64 = arith.constant dense<0.000000e+00> : vector<16x128xf32>
      %128 = tpu.matmul %127, %50, %cst_64 {dimension_numbers = #tpu.dot_dimension_numbers<[1], [0], [0], [1], [0, 0, 1, 1], [], []>} : vector<16x128xf32>, vector<128x128xf32>, vector<16x128xf32> -> vector<16x128xf32>
      %129 = vector.broadcast %51 : vector<1x128xf32> to vector<16x128xf32>
      %130 = arith.addf %128, %129 : vector<16x128xf32>
      %c0_i32_65 = arith.constant 0 : i32
      %131 = vector.broadcast %c0_i32_65 : i32 to vector<16x1xi32>
      %132 = arith.cmpi sge, %41, %131 : vector<16x1xi32>
      %133 = arith.extui %132 : vector<16x1xi1> to vector<16x1xi32>
      %134 = arith.sitofp %133 : vector<16x1xi32> to vector<16x1xf32>
      %135 = tpu.iota {dimensions = array<i32: 1>} : vector<16x128xi32>
      %136 = vector.broadcast %41 : vector<16x1xi32> to vector<16x128xi32>
      %137 = arith.cmpi eq, %135, %136 : vector<16x128xi32>
      %138 = arith.extui %137 : vector<16x128xi1> to vector<16x128xi32>
      %139 = arith.sitofp %138 : vector<16x128xi32> to vector<16x128xf32>
      %cst_66 = arith.constant dense<0xFF800000> : vector<16xf32>
      %140 = vector.multi_reduction <maximumf>, %130, %cst_66 [1] : vector<16x128xf32> to vector<16xf32>
      %141 = vector.shape_cast %140 : vector<16xf32> to vector<16x1xf32>
      %142 = vector.broadcast %141 : vector<16x1xf32> to vector<16x128xf32>
      %143 = arith.subf %130, %142 : vector<16x128xf32>
      %144 = math.exp %143 : vector<16x128xf32>
      %cst_67 = arith.constant dense<0.000000e+00> : vector<16xf32>
      %145 = vector.multi_reduction <add>, %144, %cst_67 [1] : vector<16x128xf32> to vector<16xf32>
      %146 = vector.shape_cast %145 : vector<16xf32> to vector<16x1xf32>
      %147 = math.log %146 : vector<16x1xf32>
      %148 = arith.addf %141, %147 : vector<16x1xf32>
      %149 = vector.broadcast %148 : vector<16x1xf32> to vector<16x128xf32>
      %150 = arith.subf %130, %149 : vector<16x128xf32>
      %151 = arith.mulf %139, %150 : vector<16x128xf32>
      %cst_68 = arith.constant dense<0.000000e+00> : vector<16xf32>
      %152 = vector.multi_reduction <add>, %151, %cst_68 [1] : vector<16x128xf32> to vector<16xf32>
      %153 = vector.shape_cast %152 : vector<16xf32> to vector<16x1xf32>
      %cst_69 = arith.constant 0.000000e+00 : f32
      %154 = vector.broadcast %cst_69 : f32 to vector<16x1xf32>
      %155 = arith.subf %154, %153 : vector<16x1xf32>
      %156 = arith.mulf %134, %155 : vector<16x1xf32>
      %cst_70 = arith.constant dense<0.000000e+00> : vector<1xf32>
      %157 = vector.multi_reduction <add>, %156, %cst_70 [0] : vector<16x1xf32> to vector<1xf32>
      %158 = vector.shape_cast %157 : vector<1xf32> to vector<1x1xf32>
      %cst_71 = arith.constant dense<0.000000e+00> : vector<1xf32>
      %159 = vector.multi_reduction <add>, %134, %cst_71 [0] : vector<16x1xf32> to vector<1xf32>
      %160 = vector.shape_cast %159 : vector<1xf32> to vector<1x1xf32>
      %161 = arith.divf %158, %160 : vector<1x1xf32>
      %cst_72 = arith.constant dense<0xFF800000> : vector<16xf32>
      %162 = vector.multi_reduction <maximumf>, %54, %cst_72 [1] : vector<16x128xf32> to vector<16xf32>
      %163 = vector.shape_cast %162 : vector<16xf32> to vector<16x1xf32>
      %164 = vector.broadcast %163 : vector<16x1xf32> to vector<16x128xf32>
      %165 = arith.subf %54, %164 : vector<16x128xf32>
      %166 = math.exp %165 : vector<16x128xf32>
      %cst_73 = arith.constant dense<0.000000e+00> : vector<16xf32>
      %167 = vector.multi_reduction <add>, %166, %cst_73 [1] : vector<16x128xf32> to vector<16xf32>
      %168 = vector.shape_cast %167 : vector<16xf32> to vector<16x1xf32>
      %169 = math.log %168 : vector<16x1xf32>
      %170 = arith.addf %163, %169 : vector<16x1xf32>
      %171 = vector.broadcast %170 : vector<16x1xf32> to vector<16x128xf32>
      %172 = arith.subf %54, %171 : vector<16x128xf32>
      %173 = arith.mulf %139, %172 : vector<16x128xf32>
      %cst_74 = arith.constant dense<0.000000e+00> : vector<16xf32>
      %174 = vector.multi_reduction <add>, %173, %cst_74 [1] : vector<16x128xf32> to vector<16xf32>
      %175 = vector.shape_cast %174 : vector<16xf32> to vector<16x1xf32>
      %cst_75 = arith.constant 0.000000e+00 : f32
      %176 = vector.broadcast %cst_75 : f32 to vector<16x1xf32>
      %177 = arith.subf %176, %175 : vector<16x1xf32>
      %178 = arith.mulf %134, %177 : vector<16x1xf32>
      %cst_76 = arith.constant dense<0.000000e+00> : vector<1xf32>
      %179 = vector.multi_reduction <add>, %178, %cst_76 [0] : vector<16x1xf32> to vector<1xf32>
      %180 = vector.shape_cast %179 : vector<1xf32> to vector<1x1xf32>
      %cst_77 = arith.constant dense<0.000000e+00> : vector<1xf32>
      %181 = vector.multi_reduction <add>, %134, %cst_77 [0] : vector<16x1xf32> to vector<1xf32>
      %182 = vector.shape_cast %181 : vector<1xf32> to vector<1x1xf32>
      %183 = arith.divf %180, %182 : vector<1x1xf32>
      %184 = arith.addf %161, %183 : vector<1x1xf32>
      %cst_78 = arith.constant dense<0xFF800000> : vector<16xf32>
      %185 = vector.multi_reduction <maximumf>, %130, %cst_78 [1] : vector<16x128xf32> to vector<16xf32>
      %186 = vector.shape_cast %185 : vector<16xf32> to vector<16x1xf32>
      %187 = vector.broadcast %186 : vector<16x1xf32> to vector<16x128xf32>
      %188 = arith.cmpf oeq, %130, %187 : vector<16x128xf32>
      %c128_i32 = arith.constant 128 : i32
      %189 = vector.broadcast %c128_i32 : i32 to vector<16x128xi32>
      %190 = arith.select %188, %135, %189 : vector<16x128xi1>, vector<16x128xi32>
      %cst_79 = arith.constant dense<2147483647> : vector<16xi32>
      %191 = vector.multi_reduction <minsi>, %190, %cst_79 [1] : vector<16x128xi32> to vector<16xi32>
      %192 = vector.shape_cast %191 : vector<16xi32> to vector<16x1xi32>
      %193 = arith.cmpi eq, %192, %41 : vector<16x1xi32>
      %194 = arith.extui %193 : vector<16x1xi1> to vector<16x1xi32>
      %195 = arith.sitofp %194 : vector<16x1xi32> to vector<16x1xf32>
      %196 = arith.mulf %195, %134 : vector<16x1xf32>
      %cst_80 = arith.constant dense<0.000000e+00> : vector<1xf32>
      %197 = vector.multi_reduction <add>, %196, %cst_80 [0] : vector<16x1xf32> to vector<1xf32>
      %198 = vector.shape_cast %197 : vector<1xf32> to vector<1x1xf32>
      %cst_81 = arith.constant dense<0.000000e+00> : vector<1xf32>
      %199 = vector.multi_reduction <add>, %134, %cst_81 [0] : vector<16x1xf32> to vector<1xf32>
      %200 = vector.shape_cast %199 : vector<1xf32> to vector<1x1xf32>
      %201 = arith.divf %198, %200 : vector<1x1xf32>
      %c0_82 = arith.constant 0 : index
      %c0_83 = arith.constant 0 : index
      %202 = vector.load %arg17[%c0_82, %c0_83] : memref<16x128xf32, #tpu.memory_space<vmem>>, vector<16x128xf32>
      tpu.vector_store %arg17[%c0_82, %c0_83], %127 {strides = array<i32>} : memref<16x128xf32, #tpu.memory_space<vmem>>, vector<16x128xf32>,
      %c0_84 = arith.constant 0 : index
      %c0_85 = arith.constant 0 : index
      %203 = vector.load %arg18[%c0_84, %c0_85] : memref<16x128xf32, #tpu.memory_space<vmem>>, vector<16x128xf32>
      tpu.vector_store %arg18[%c0_84, %c0_85], %130 {strides = array<i32>} : memref<16x128xf32, #tpu.memory_space<vmem>>, vector<16x128xf32>,
      %204 = tpu.iota {dimensions = array<i32: 1>} : vector<1x128xi32>
      %c0_i32_86 = arith.constant 0 : i32
      %205 = vector.broadcast %c0_i32_86 : i32 to vector<1x128xi32>
      %206 = arith.cmpi eq, %204, %205 : vector<1x128xi32>
      %c1_i32 = arith.constant 1 : i32
      %207 = vector.broadcast %c1_i32 : i32 to vector<1x128xi32>
      %208 = arith.cmpi eq, %204, %207 : vector<1x128xi32>
      %cst_87 = arith.constant 0.000000e+00 : f32
      %209 = vector.shape_cast %201 : vector<1x1xf32> to vector<1x1xf32>
      %210 = vector.broadcast %209 : vector<1x1xf32> to vector<1x128xf32>
      %211 = vector.broadcast %cst_87 : f32 to vector<1x128xf32>
      %212 = arith.select %208, %210, %211 : vector<1x128xi1>, vector<1x128xf32>
      %213 = vector.shape_cast %184 : vector<1x1xf32> to vector<1x1xf32>
      %214 = vector.broadcast %213 : vector<1x1xf32> to vector<1x128xf32>
      %215 = arith.select %206, %214, %212 : vector<1x128xi1>, vector<1x128xf32>
      %c0_88 = arith.constant 0 : index
      %c0_89 = arith.constant 0 : index
      %216 = vector.load %arg19[%c0_88, %c0_89] : memref<1x128xf32, #tpu.memory_space<vmem>>, vector<1x128xf32>
      tpu.vector_store %arg19[%c0_88, %c0_89], %215 {strides = array<i32>} : memref<1x128xf32, #tpu.memory_space<vmem>>, vector<1x128xf32>,
    } else {
    }
    return
  }
  func.func @transform_0(%arg0: i32) -> (i32, i32) {
    %c0_i32 = arith.constant 0 : i32
    %c0_i32_0 = arith.constant 0 : i32
    return %c0_i32, %arg0 : i32, i32
  }
  func.func @transform_1(%arg0: i32) -> (i32, i32) {
    %c0_i32 = arith.constant 0 : i32
    %c0_i32_0 = arith.constant 0 : i32
    return %c0_i32, %arg0 : i32, i32
  }
  func.func @transform_2(%arg0: i32) -> (i32, i32) {
    %c0_i32 = arith.constant 0 : i32
    %c0_i32_0 = arith.constant 0 : i32
    return %c0_i32, %arg0 : i32, i32
  }
  func.func @transform_3(%arg0: i32) -> (i32, i32) {
    %c0_i32 = arith.constant 0 : i32
    %c0_i32_0 = arith.constant 0 : i32
    return %arg0, %c0_i32 : i32, i32
  }
  func.func @transform_4(%arg0: i32) -> (i32, i32) {
    %c0_i32 = arith.constant 0 : i32
    %c0_i32_0 = arith.constant 0 : i32
    %c0_i32_1 = arith.constant 0 : i32
    return %c0_i32, %c0_i32_0 : i32, i32
  }
  func.func @transform_5(%arg0: i32) -> (i32, i32) {
    %c0_i32 = arith.constant 0 : i32
    %c0_i32_0 = arith.constant 0 : i32
    %c0_i32_1 = arith.constant 0 : i32
    return %c0_i32, %c0_i32_0 : i32, i32
  }
  func.func @transform_6(%arg0: i32) -> (i32, i32) {
    %c0_i32 = arith.constant 0 : i32
    %c0_i32_0 = arith.constant 0 : i32
    %c0_i32_1 = arith.constant 0 : i32
    return %c0_i32, %c0_i32_0 : i32, i32
  }
  func.func @transform_7(%arg0: i32) -> (i32, i32) {
    %c0_i32 = arith.constant 0 : i32
    %c0_i32_0 = arith.constant 0 : i32
    %c0_i32_1 = arith.constant 0 : i32
    return %c0_i32, %c0_i32_0 : i32, i32
  }
  func.func @transform_8(%arg0: i32) -> (i32, i32) {
    %c0_i32 = arith.constant 0 : i32
    %c0_i32_0 = arith.constant 0 : i32
    %c0_i32_1 = arith.constant 0 : i32
    return %c0_i32, %c0_i32_0 : i32, i32
  }
  func.func @transform_9(%arg0: i32) -> (i32, i32) {
    %c0_i32 = arith.constant 0 : i32
    %c0_i32_0 = arith.constant 0 : i32
    %c0_i32_1 = arith.constant 0 : i32
    return %c0_i32, %c0_i32_0 : i32, i32
  }
  func.func @transform_10(%arg0: i32) -> (i32, i32) {
    %c0_i32 = arith.constant 0 : i32
    %c0_i32_0 = arith.constant 0 : i32
    %c0_i32_1 = arith.constant 0 : i32
    return %c0_i32, %c0_i32_0 : i32, i32
  }
  func.func @transform_11(%arg0: i32) -> (i32, i32) {
    %c0_i32 = arith.constant 0 : i32
    %c0_i32_0 = arith.constant 0 : i32
    %c0_i32_1 = arith.constant 0 : i32
    return %c0_i32, %c0_i32_0 : i32, i32
  }
  func.func @transform_12(%arg0: i32) -> (i32, i32) {
    %c0_i32 = arith.constant 0 : i32
    %c0_i32_0 = arith.constant 0 : i32
    %c0_i32_1 = arith.constant 0 : i32
    return %c0_i32, %c0_i32_0 : i32, i32
  }
  func.func @transform_13(%arg0: i32) -> (i32, i32) {
    %c0_i32 = arith.constant 0 : i32
    %c0_i32_0 = arith.constant 0 : i32
    %c0_i32_1 = arith.constant 0 : i32
    return %c0_i32, %c0_i32_0 : i32, i32
  }
  func.func @transform_14(%arg0: i32) -> (i32, i32) {
    %c0_i32 = arith.constant 0 : i32
    %c0_i32_0 = arith.constant 0 : i32
    %c0_i32_1 = arith.constant 0 : i32
    return %c0_i32, %c0_i32_0 : i32, i32
  }
  func.func @transform_15(%arg0: i32) -> (i32, i32) {
    %c0_i32 = arith.constant 0 : i32
    %c0_i32_0 = arith.constant 0 : i32
    %c0_i32_1 = arith.constant 0 : i32
    return %c0_i32, %c0_i32_0 : i32, i32
  }
  func.func @transform_16(%arg0: i32) -> (i32, i32) {
    %c0_i32 = arith.constant 0 : i32
    %c0_i32_0 = arith.constant 0 : i32
    %c0_i32_1 = arith.constant 0 : i32
    return %c0_i32, %c0_i32_0 : i32, i32
  }
  func.func @transform_17(%arg0: i32) -> (i32, i32) {
    %c0_i32 = arith.constant 0 : i32
    %c0_i32_0 = arith.constant 0 : i32
    %c0_i32_1 = arith.constant 0 : i32
    return %c0_i32, %c0_i32_0 : i32, i32
  }
  func.func @transform_18(%arg0: i32) -> (i32, i32) {
    %c0_i32 = arith.constant 0 : i32
    %c0_i32_0 = arith.constant 0 : i32
    %c0_i32_1 = arith.constant 0 : i32
    return %c0_i32, %c0_i32_0 : i32, i32
  }
}

</mosaic_0001>

<llo_original>
// kernel: tpu_custom_call.1
$region0: #{tpu_custom_call.1}
  #allocation0 [shape = 'u32[]', space=smem, size = 0x4, offset = 0x4, fixed_abs, tag = 'smem constant byte address 0x4 - core index']
  #allocation1 [shape = 'u32[144,128]{1,0:T(1,128)}', space=vmem, size = 0x12000, scoped, tag = 'internal scratch']
  #allocation2 [shape = 'f32[16,384]{1,0:T(8,128)}', space=vmem, size = 0x6000, scoped, tag = 'scratch operand']
  %s0 = inlined_call_operand.hbm [shape: f32[16,384], index: 0, kind: input, shape index: {}]
  %s1 = inlined_call_operand.vmem [shape: f32[1,384], index: 1, kind: input, shape index: {}]
  %s2 = inlined_call_operand.vmem [shape: f32[1,384], index: 2, kind: input, shape index: {}]
  %s3 = inlined_call_operand.hbm [shape: bf16[384,384], index: 3, kind: input, shape index: {}]
  %s4 = inlined_call_operand.vmem [shape: f32[16,16], index: 4, kind: input, shape index: {}]
  %s5 = inlined_call_operand.vmem [shape: s32[16,1], index: 5, kind: input, shape index: {}]
  %s6 = inlined_call_operand.vmem [shape: f32[1,128], index: 6, kind: input, shape index: {}]
  %s7 = inlined_call_operand.vmem [shape: f32[1,128], index: 7, kind: input, shape index: {}]
  %s8 = inlined_call_operand.vmem [shape: f32[1,128], index: 8, kind: input, shape index: {}]
  %s9 = inlined_call_operand.vmem [shape: f32[1,128], index: 9, kind: input, shape index: {}]
  %s10 = inlined_call_operand.hbm [shape: bf16[128,128], index: 10, kind: input, shape index: {}]
  %s11 = inlined_call_operand.vmem [shape: f32[1,128], index: 11, kind: input, shape index: {}]
  %s12 = inlined_call_operand.vmem [shape: f32[1,128], index: 12, kind: input, shape index: {}]
  %s13 = inlined_call_operand.vmem [shape: f32[1,128], index: 13, kind: input, shape index: {}]
  %s14 = inlined_call_operand.hbm [shape: f32[128,128], index: 14, kind: input, shape index: {}]
  %s15 = inlined_call_operand.vmem [shape: f32[1,128], index: 15, kind: input, shape index: {}]
  %s16 = inlined_call_operand.hbm [shape: f32[16,128], index: 16, kind: output, shape index: {0}]
  %s17 = inlined_call_operand.hbm [shape: f32[16,128], index: 17, kind: output, shape index: {1}]
  %s18 = inlined_call_operand.hbm [shape: f32[1,128], index: 18, kind: output, shape index: {2}]
  %19 = xla_tuple %s16, %s17, %s18
  %s20 = sld [smem:[#allocation0]]
  $region137: #{tpu_custom_call.1} parent=0
    _
  %s22 = ssub.s32 1, %s20
  %s23 = scalar_select 0, %s22, %s20
  $region1: #{tpu_custom_call.1} parent=0
    #allocation3 [shape = 'u8[16384]{0}', space=vmem, size = 0x4000, scoped, tag = 'input window, operand 0']
    #allocation4 [shape = 's32[2]{0}', space=sflag, size = 0x8, scoped, tag = 'scoped memory for tpu_custom_call.1']
    #allocation5 [shape = 's32[2]{0}', space=sflag, size = 0x8, scoped, tag = 'scoped memory for tpu_custom_call.1']
    #allocation6 [shape = 'u8[196608]{0}', space=vmem, size = 0x30000, scoped, tag = 'input window, operand 3']
    #allocation7 [shape = 's32[2]{0}', space=sflag, size = 0x8, scoped, tag = 'scoped memory for tpu_custom_call.1']
    #allocation8 [shape = 'u8[32768]{0}', space=vmem, size = 0x8000, scoped, tag = 'input window, operand 10, single buffered']
    #allocation9 [shape = 'u8[65536]{0}', space=vmem, size = 0x10000, scoped, tag = 'input window, operand 14, single buffered']
    #allocation10 [shape = 's32[1]{0}', space=sflag, size = 0x4, scoped, tag = 'scoped memory for tpu_custom_call.1']
    #allocation11 [shape = 'u8[8192]{0}', space=vmem, size = 0x2000, scoped, tag = 'output window, operand 0, single buffered']
    #allocation12 [shape = 'u8[8192]{0}', space=vmem, size = 0x2000, scoped, tag = 'output window, operand 1, single buffered']
    #allocation13 [shape = 's32[1]{0}', space=sflag, size = 0x4, scoped, tag = 'scoped memory for tpu_custom_call.1']
    #allocation14 [shape = 'u8[512]{0}', space=vmem, size = 0x400, scoped, tag = 'output window, operand 2, single buffered']
    %24 = vsyncpa [#allocation4], 0
    %s25 = scalar_lea.sflag [#allocation4], 1
    %26 = vsyncpa %s25, 0
    %27 = vsyncpa [#allocation7], 0
    %s28 = scalar_lea.sflag [#allocation7], 1
    %29 = vsyncpa %s28, 0
    %30 = vsyncpa [#allocation10], 0
    %31 = vsyncpa [#allocation5], 0
    %32 = vsyncpa [#allocation13], 0
    loop: start=0, step=1, limit=5
    $region2: #{tpu_custom_call.1} parent=1 // loop_pre_header
      _
    $region3: #{tpu_custom_call.1} parent=1 // loop_header
      %s34 = sphi 0, %s38
      %p35 = scmp.ge.s32.totalorder %s34, 5
      %s44 = sphi 0, %s46
      %s47 = sphi 0, %s44
      %s48 = sphi 0, %s47
      %s64 = sphi 0, %s48
      %s70 = sphi 0, %s72
      %s73 = sphi 0, %s70
      %s74 = sphi 0, %s73
      %s90 = sphi 0, %s74
      %s96 = sphi 0, %s98
      %s99 = sphi 0, %s96
      %s100 = sphi 0, %s99
      %s116 = sphi 0, %s100
      %s122 = sphi 0, %s124
      %s125 = sphi 0, %s122
      %s126 = sphi 0, %s125
      %s142 = sphi 0, %s126
      %s146 = sphi 0, %s146
      %s148 = sphi 0, %s146
      %s149 = sphi 0, %s148
      %s163 = sphi 0, %s149
      %s167 = sphi 0, %s167
      %s169 = sphi 0, %s167
      %s170 = sphi 0, %s169
      %s184 = sphi 0, %s170
      %s188 = sphi 0, %s188
      %s190 = sphi 0, %s188
      %s191 = sphi 0, %s190
      %s205 = sphi 0, %s191
      %s209 = sphi 0, %s209
      %s211 = sphi 0, %s209
      %s212 = sphi 0, %s211
      %s226 = sphi 0, %s212
      %s230 = sphi 0, %s230
      %s232 = sphi 0, %s230
      %s233 = sphi 0, %s232
      %s247 = sphi 0, %s233
      %s251 = sphi 0, %s251
      %s253 = sphi 0, %s251
      %s254 = sphi 0, %s253
      %s268 = sphi 0, %s254
      %s272 = sphi 0, %s272
      %s274 = sphi 0, %s272
      %s275 = sphi 0, %s274
      %s289 = sphi 0, %s275
      %s293 = sphi 0, %s293
      %s295 = sphi 0, %s293
      %s296 = sphi 0, %s295
      %s310 = sphi 0, %s296
      %s314 = sphi 0, %s314
      %s316 = sphi 0, %s314
      %s317 = sphi 0, %s316
      %s331 = sphi 0, %s317
      %s335 = sphi 0, %s335
      %s337 = sphi 0, %s335
      %s338 = sphi 0, %s337
      %s352 = sphi 0, %s338
      %s356 = sphi 0, %s356
      %s358 = sphi 0, %s356
      %s359 = sphi 0, %s358
      %s373 = sphi 0, %s359
      %s377 = sphi 0, %s377
      %s379 = sphi 0, %s377
      %s380 = sphi 0, %s379
      %s394 = sphi 0, %s380
      %s398 = sphi 0, %s398
      %s400 = sphi 0, %s398
      %s401 = sphi 0, %s400
      %s415 = sphi 0, %s401
      %s419 = sphi 0, %s419
      %s421 = sphi 0, %s419
      %s422 = sphi 0, %s421
      %s436 = sphi 0, %s422
      %s440 = sphi 0, %s440
      %s442 = sphi 0, %s440
      %s443 = sphi 0, %s442
      %s457 = sphi 0, %s443
    $region4: #{tpu_custom_call.1} parent=1 // loop_header_branch
      %37 = sbr.rel (%p35) target = $region8
    $region5: #{tpu_custom_call.1} parent=1 // loop_body
      %s39 = ssub.s32 %s34, 1
      %s40 = ssub.s32 %s34, 2
      %s41 = sadd.s32 %s34, 1
      %s42 = ssub.s32 %s34, %s41
      %p43 = scmp.eq.s32.totalorder %s42, 0
      %s45 = sadd.s32 %s44, 1
      %s46 = scalar_select %p43, %s44, %s45
      %p49 = pneg %p43
      %p50 = scmp.eq.s32.totalorder %s34, 2
      %p51 = por %p49, %p50
      %p52 = scmp.ne.s32.totalorder %s44, %s47
      %p53 = scmp.eq.s32.totalorder %s34, 0
      %p54 = por %p52, %p53
      %p55 = scmp.ne.s32.totalorder %s44, %s47
      %p56 = scmp.eq.s32.totalorder %s39, 2
      %p57 = por %p55, %p56
      %p58 = scmp.ne.s32.totalorder %s47, %s48
      %p59 = scmp.eq.s32.totalorder %s39, 0
      %p60 = por %p58, %p59
      %p61 = scmp.ne.s32.totalorder %s47, %s48
      %p62 = scmp.eq.s32.totalorder %s40, 2
      %p63 = por %p61, %p62
      %p65 = scmp.ne.s32.totalorder %s48, %s64
      %p66 = scmp.eq.s32.totalorder %s40, 0
      %p67 = por %p65, %p66
      %s68 = ssub.s32 %s34, %s41
      %p69 = scmp.eq.s32.totalorder %s68, 0
      %s71 = sadd.s32 %s70, 1
      %s72 = scalar_select %p69, %s70, %s71
      %p75 = pneg %p69
      %p76 = scmp.eq.s32.totalorder %s34, 2
      %p77 = por %p75, %p76
      %p78 = scmp.ne.s32.totalorder %s70, %s73
      %p79 = scmp.eq.s32.totalorder %s34, 0
      %p80 = por %p78, %p79
      %p81 = scmp.ne.s32.totalorder %s70, %s73
      %p82 = scmp.eq.s32.totalorder %s39, 2
      %p83 = por %p81, %p82
      %p84 = scmp.ne.s32.totalorder %s73, %s74
      %p85 = scmp.eq.s32.totalorder %s39, 0
      %p86 = por %p84, %p85
      %p87 = scmp.ne.s32.totalorder %s73, %s74
      %p88 = scmp.eq.s32.totalorder %s40, 2
      %p89 = por %p87, %p88
      %p91 = scmp.ne.s32.totalorder %s74, %s90
      %p92 = scmp.eq.s32.totalorder %s40, 0
      %p93 = por %p91, %p92
      %s94 = ssub.s32 %s34, %s41
      %p95 = scmp.eq.s32.totalorder %s94, 0
      %s97 = sadd.s32 %s96, 1
      %s98 = scalar_select %p95, %s96, %s97
      %p101 = pneg %p95
      %p102 = scmp.eq.s32.totalorder %s34, 2
      %p103 = por %p101, %p102
      %p104 = scmp.ne.s32.totalorder %s96, %s99
      %p105 = scmp.eq.s32.totalorder %s34, 0
      %p106 = por %p104, %p105
      %p107 = scmp.ne.s32.totalorder %s96, %s99
      %p108 = scmp.eq.s32.totalorder %s39, 2
      %p109 = por %p107, %p108
      %p110 = scmp.ne.s32.totalorder %s99, %s100
      %p111 = scmp.eq.s32.totalorder %s39, 0
      %p112 = por %p110, %p111
      %p113 = scmp.ne.s32.totalorder %s99, %s100
      %p114 = scmp.eq.s32.totalorder %s40, 2
      %p115 = por %p113, %p114
      %p117 = scmp.ne.s32.totalorder %s100, %s116
      %p118 = scmp.eq.s32.totalorder %s40, 0
      %p119 = por %p117, %p118
      %s120 = ssub.s32 %s34, %s41
      %p121 = scmp.eq.s32.totalorder %s120, 0
      %s123 = sadd.s32 %s122, 1
      %s124 = scalar_select %p121, %s122, %s123
      %p127 = pneg %p121
      %p128 = scmp.eq.s32.totalorder %s34, 2
      %p129 = por %p127, %p128
      %p130 = scmp.ne.s32.totalorder %s122, %s125
      %p131 = scmp.eq.s32.totalorder %s34, 0
      %p132 = por %p130, %p131
      %p133 = scmp.ne.s32.totalorder %s122, %s125
      %p134 = scmp.eq.s32.totalorder %s39, 2
      %p135 = por %p133, %p134
      %p136 = scmp.ne.s32.totalorder %s125, %s126
      %p137 = scmp.eq.s32.totalorder %s39, 0
      %p138 = por %p136, %p137
      %p139 = scmp.ne.s32.totalorder %s125, %s126
      %p140 = scmp.eq.s32.totalorder %s40, 2
      %p141 = por %p139, %p140
      %p143 = scmp.ne.s32.totalorder %s126, %s142
      %p144 = scmp.eq.s32.totalorder %s40, 0
      %p145 = por %p143, %p144
      %s147 = sadd.s32 %s146, 1
      %p150 = scmp.eq.s32.totalorder %s34, 2
      %p151 = scmp.ne.s32.totalorder %s146, %s148
      %p152 = scmp.eq.s32.totalorder %s34, 0
      %p153 = por %p151, %p152
      %p154 = scmp.ne.s32.totalorder %s146, %s148
      %p155 = scmp.eq.s32.totalorder %s39, 2
      %p156 = por %p154, %p155
      %p157 = scmp.ne.s32.totalorder %s148, %s149
      %p158 = scmp.eq.s32.totalorder %s39, 0
      %p159 = por %p157, %p158
      %p160 = scmp.ne.s32.totalorder %s148, %s149
      %p161 = scmp.eq.s32.totalorder %s40, 2
      %p162 = por %p160, %p161
      %p164 = scmp.ne.s32.totalorder %s149, %s163
      %p165 = scmp.eq.s32.totalorder %s40, 0
      %p166 = por %p164, %p165
      %s168 = sadd.s32 %s167, 1
      %p171 = scmp.eq.s32.totalorder %s34, 2
      %p172 = scmp.ne.s32.totalorder %s167, %s169
      %p173 = scmp.eq.s32.totalorder %s34, 0
      %p174 = por %p172, %p173
      %p175 = scmp.ne.s32.totalorder %s167, %s169
      %p176 = scmp.eq.s32.totalorder %s39, 2
      %p177 = por %p175, %p176
      %p178 = scmp.ne.s32.totalorder %s169, %s170
      %p179 = scmp.eq.s32.totalorder %s39, 0
      %p180 = por %p178, %p179
      %p181 = scmp.ne.s32.totalorder %s169, %s170
      %p182 = scmp.eq.s32.totalorder %s40, 2
      %p183 = por %p181, %p182
      %p185 = scmp.ne.s32.totalorder %s170, %s184
      %p186 = scmp.eq.s32.totalorder %s40, 0
      %p187 = por %p185, %p186
      %s189 = sadd.s32 %s188, 1
      %p192 = scmp.eq.s32.totalorder %s34, 2
      %p193 = scmp.ne.s32.totalorder %s188, %s190
      %p194 = scmp.eq.s32.totalorder %s34, 0
      %p195 = por %p193, %p194
      %p196 = scmp.ne.s32.totalorder %s188, %s190
      %p197 = scmp.eq.s32.totalorder %s39, 2
      %p198 = por %p196, %p197
      %p199 = scmp.ne.s32.totalorder %s190, %s191
      %p200 = scmp.eq.s32.totalorder %s39, 0
      %p201 = por %p199, %p200
      %p202 = scmp.ne.s32.totalorder %s190, %s191
      %p203 = scmp.eq.s32.totalorder %s40, 2
      %p204 = por %p202, %p203
      %p206 = scmp.ne.s32.totalorder %s191, %s205
      %p207 = scmp.eq.s32.totalorder %s40, 0
      %p208 = por %p206, %p207
      %s210 = sadd.s32 %s209, 1
      %p213 = scmp.eq.s32.totalorder %s34, 2
      %p214 = scmp.ne.s32.totalorder %s209, %s211
      %p215 = scmp.eq.s32.totalorder %s34, 0
      %p216 = por %p214, %p215
      %p217 = scmp.ne.s32.totalorder %s209, %s211
      %p218 = scmp.eq.s32.totalorder %s39, 2
      %p219 = por %p217, %p218
      %p220 = scmp.ne.s32.totalorder %s211, %s212
      %p221 = scmp.eq.s32.totalorder %s39, 0
      %p222 = por %p220, %p221
      %p223 = scmp.ne.s32.totalorder %s211, %s212
      %p224 = scmp.eq.s32.totalorder %s40, 2
      %p225 = por %p223, %p224
      %p227 = scmp.ne.s32.totalorder %s212, %s226
      %p228 = scmp.eq.s32.totalorder %s40, 0
      %p229 = por %p227, %p228
      %s231 = sadd.s32 %s230, 1
      %p234 = scmp.eq.s32.totalorder %s34, 2
      %p235 = scmp.ne.s32.totalorder %s230, %s232
      %p236 = scmp.eq.s32.totalorder %s34, 0
      %p237 = por %p235, %p236
      %p238 = scmp.ne.s32.totalorder %s230, %s232
      %p239 = scmp.eq.s32.totalorder %s39, 2
      %p240 = por %p238, %p239
      %p241 = scmp.ne.s32.totalorder %s232, %s233
      %p242 = scmp.eq.s32.totalorder %s39, 0
      %p243 = por %p241, %p242
      %p244 = scmp.ne.s32.totalorder %s232, %s233
      %p245 = scmp.eq.s32.totalorder %s40, 2
      %p246 = por %p244, %p245
      %p248 = scmp.ne.s32.totalorder %s233, %s247
      %p249 = scmp.eq.s32.totalorder %s40, 0
      %p250 = por %p248, %p249
      %s252 = sadd.s32 %s251, 1
      %p255 = scmp.eq.s32.totalorder %s34, 2
      %p256 = scmp.ne.s32.totalorder %s251, %s253
      %p257 = scmp.eq.s32.totalorder %s34, 0
      %p258 = por %p256, %p257
      %p259 = scmp.ne.s32.totalorder %s251, %s253
      %p260 = scmp.eq.s32.totalorder %s39, 2
      %p261 = por %p259, %p260
      %p262 = scmp.ne.s32.totalorder %s253, %s254
      %p263 = scmp.eq.s32.totalorder %s39, 0
      %p264 = por %p262, %p263
      %p265 = scmp.ne.s32.totalorder %s253, %s254
      %p266 = scmp.eq.s32.totalorder %s40, 2
      %p267 = por %p265, %p266
      %p269 = scmp.ne.s32.totalorder %s254, %s268
      %p270 = scmp.eq.s32.totalorder %s40, 0
      %p271 = por %p269, %p270
      %s273 = sadd.s32 %s272, 1
      %p276 = scmp.eq.s32.totalorder %s34, 2
      %p277 = scmp.ne.s32.totalorder %s272, %s274
      %p278 = scmp.eq.s32.totalorder %s34, 0
      %p279 = por %p277, %p278
      %p280 = scmp.ne.s32.totalorder %s272, %s274
      %p281 = scmp.eq.s32.totalorder %s39, 2
      %p282 = por %p280, %p281
      %p283 = scmp.ne.s32.totalorder %s274, %s275
      %p284 = scmp.eq.s32.totalorder %s39, 0
      %p285 = por %p283, %p284
      %p286 = scmp.ne.s32.totalorder %s274, %s275
      %p287 = scmp.eq.s32.totalorder %s40, 2
      %p288 = por %p286, %p287
      %p290 = scmp.ne.s32.totalorder %s275, %s289
      %p291 = scmp.eq.s32.totalorder %s40, 0
      %p292 = por %p290, %p291
      %s294 = sadd.s32 %s293, 1
      %p297 = scmp.eq.s32.totalorder %s34, 2
      %p298 = scmp.ne.s32.totalorder %s293, %s295
      %p299 = scmp.eq.s32.totalorder %s34, 0
      %p300 = por %p298, %p299
      %p301 = scmp.ne.s32.totalorder %s293, %s295
      %p302 = scmp.eq.s32.totalorder %s39, 2
      %p303 = por %p301, %p302
      %p304 = scmp.ne.s32.totalorder %s295, %s296
      %p305 = scmp.eq.s32.totalorder %s39, 0
      %p306 = por %p304, %p305
      %p307 = scmp.ne.s32.totalorder %s295, %s296
      %p308 = scmp.eq.s32.totalorder %s40, 2
      %p309 = por %p307, %p308
      %p311 = scmp.ne.s32.totalorder %s296, %s310
      %p312 = scmp.eq.s32.totalorder %s40, 0
      %p313 = por %p311, %p312
      %s315 = sadd.s32 %s314, 1
      %p318 = scmp.eq.s32.totalorder %s34, 2
      %p319 = scmp.ne.s32.totalorder %s314, %s316
      %p320 = scmp.eq.s32.totalorder %s34, 0
      %p321 = por %p319, %p320
      %p322 = scmp.ne.s32.totalorder %s314, %s316
      %p323 = scmp.eq.s32.totalorder %s39, 2
      %p324 = por %p322, %p323
      %p325 = scmp.ne.s32.totalorder %s316, %s317
      %p326 = scmp.eq.s32.totalorder %s39, 0
      %p327 = por %p325, %p326
      %p328 = scmp.ne.s32.totalorder %s316, %s317
      %p329 = scmp.eq.s32.totalorder %s40, 2
      %p330 = por %p328, %p329
      %p332 = scmp.ne.s32.totalorder %s317, %s331
      %p333 = scmp.eq.s32.totalorder %s40, 0
      %p334 = por %p332, %p333
      %s336 = sadd.s32 %s335, 1
      %p339 = scmp.eq.s32.totalorder %s34, 2
      %p340 = scmp.ne.s32.totalorder %s335, %s337
      %p341 = scmp.eq.s32.totalorder %s34, 0
      %p342 = por %p340, %p341
      %p343 = scmp.ne.s32.totalorder %s335, %s337
      %p344 = scmp.eq.s32.totalorder %s39, 2
      %p345 = por %p343, %p344
      %p346 = scmp.ne.s32.totalorder %s337, %s338
      %p347 = scmp.eq.s32.totalorder %s39, 0
      %p348 = por %p346, %p347
      %p349 = scmp.ne.s32.totalorder %s337, %s338
      %p350 = scmp.eq.s32.totalorder %s40, 2
      %p351 = por %p349, %p350
      %p353 = scmp.ne.s32.totalorder %s338, %s352
      %p354 = scmp.eq.s32.totalorder %s40, 0
      %p355 = por %p353, %p354
      %s357 = sadd.s32 %s356, 1
      %p360 = scmp.eq.s32.totalorder %s34, 2
      %p361 = scmp.ne.s32.totalorder %s356, %s358
      %p362 = scmp.eq.s32.totalorder %s34, 0
      %p363 = por %p361, %p362
      %p364 = scmp.ne.s32.totalorder %s356, %s358
      %p365 = scmp.eq.s32.totalorder %s39, 2
      %p366 = por %p364, %p365
      %p367 = scmp.ne.s32.totalorder %s358, %s359
      %p368 = scmp.eq.s32.totalorder %s39, 0
      %p369 = por %p367, %p368
      %p370 = scmp.ne.s32.totalorder %s358, %s359
      %p371 = scmp.eq.s32.totalorder %s40, 2
      %p372 = por %p370, %p371
      %p374 = scmp.ne.s32.totalorder %s359, %s373
      %p375 = scmp.eq.s32.totalorder %s40, 0
      %p376 = por %p374, %p375
      %s378 = sadd.s32 %s377, 1
      %p381 = scmp.eq.s32.totalorder %s34, 2
      %p382 = scmp.ne.s32.totalorder %s377, %s379
      %p383 = scmp.eq.s32.totalorder %s34, 0
      %p384 = por %p382, %p383
      %p385 = scmp.ne.s32.totalorder %s377, %s379
      %p386 = scmp.eq.s32.totalorder %s39, 2
      %p387 = por %p385, %p386
      %p388 = scmp.ne.s32.totalorder %s379, %s380
      %p389 = scmp.eq.s32.totalorder %s39, 0
      %p390 = por %p388, %p389
      %p391 = scmp.ne.s32.totalorder %s379, %s380
      %p392 = scmp.eq.s32.totalorder %s40, 2
      %p393 = por %p391, %p392
      %p395 = scmp.ne.s32.totalorder %s380, %s394
      %p396 = scmp.eq.s32.totalorder %s40, 0
      %p397 = por %p395, %p396
      %s399 = sadd.s32 %s398, 1
      %p402 = scmp.eq.s32.totalorder %s34, 2
      %p403 = scmp.ne.s32.totalorder %s398, %s400
      %p404 = scmp.eq.s32.totalorder %s34, 0
      %p405 = por %p403, %p404
      %p406 = scmp.ne.s32.totalorder %s398, %s400
      %p407 = scmp.eq.s32.totalorder %s39, 2
      %p408 = por %p406, %p407
      %p409 = scmp.ne.s32.totalorder %s400, %s401
      %p410 = scmp.eq.s32.totalorder %s39, 0
      %p411 = por %p409, %p410
      %p412 = scmp.ne.s32.totalorder %s400, %s401
      %p413 = scmp.eq.s32.totalorder %s40, 2
      %p414 = por %p412, %p413
      %p416 = scmp.ne.s32.totalorder %s401, %s415
      %p417 = scmp.eq.s32.totalorder %s40, 0
      %p418 = por %p416, %p417
      %s420 = sadd.s32 %s419, 1
      %p423 = scmp.eq.s32.totalorder %s34, 2
      %p424 = scmp.ne.s32.totalorder %s419, %s421
      %p425 = scmp.eq.s32.totalorder %s34, 0
      %p426 = por %p424, %p425
      %p427 = scmp.ne.s32.totalorder %s419, %s421
      %p428 = scmp.eq.s32.totalorder %s39, 2
      %p429 = por %p427, %p428
      %p430 = scmp.ne.s32.totalorder %s421, %s422
      %p431 = scmp.eq.s32.totalorder %s39, 0
      %p432 = por %p430, %p431
      %p433 = scmp.ne.s32.totalorder %s421, %s422
      %p434 = scmp.eq.s32.totalorder %s40, 2
      %p435 = por %p433, %p434
      %p437 = scmp.ne.s32.totalorder %s422, %s436
      %p438 = scmp.eq.s32.totalorder %s40, 0
      %p439 = por %p437, %p438
      %s441 = sadd.s32 %s440, 1
      %p444 = scmp.eq.s32.totalorder %s34, 2
      %p445 = scmp.ne.s32.totalorder %s440, %s442
      %p446 = scmp.eq.s32.totalorder %s34, 0
      %p447 = por %p445, %p446
      %p448 = scmp.ne.s32.totalorder %s440, %s442
      %p449 = scmp.eq.s32.totalorder %s39, 2
      %p450 = por %p448, %p449
      %p451 = scmp.ne.s32.totalorder %s442, %s443
      %p452 = scmp.eq.s32.totalorder %s39, 0
      %p453 = por %p451, %p452
      %p454 = scmp.ne.s32.totalorder %s442, %s443
      %p455 = scmp.eq.s32.totalorder %s40, 2
      %p456 = por %p454, %p455
      %p458 = scmp.ne.s32.totalorder %s443, %s457
      %p459 = scmp.eq.s32.totalorder %s40, 0
      %p460 = por %p458, %p459
      %p461 = scmp.le.s32.totalorder 1, %s34
      %p462 = scmp.lt.s32.totalorder %s34, 4
      %p463 = pnand %p461, %p462
      %p464 = pneg %p463
      // Predicated region
      $region9: #{tpu_custom_call.1} parent=5 // pred_check
        _
      $region10: #{tpu_custom_call.1} parent=5 // pred_check_branch
        %466 = sbr.rel (%p463) target = $region12
      $region11: #{tpu_custom_call.1} parent=5 // pred_region
        %s467 = ssub.s32 %s34, 1
        // Predicated region
        $region13: #{tpu_custom_call.1} parent=11 // pred_check
          %p468 = pneg %p159
        $region14: #{tpu_custom_call.1} parent=11 // pred_check_branch
          %470 = sbr.rel (%p468) target = $region16
        $region15: #{tpu_custom_call.1} parent=11 // pred_region
          _
        $region16: #{tpu_custom_call.1} parent=11 // pred_fallthru
          _
        // Predicated region
        $region17: #{tpu_custom_call.1} parent=11 // pred_check
          %p471 = pneg %p180
        $region18: #{tpu_custom_call.1} parent=11 // pred_check_branch
          %473 = sbr.rel (%p471) target = $region20
        $region19: #{tpu_custom_call.1} parent=11 // pred_region
          _
        $region20: #{tpu_custom_call.1} parent=11 // pred_fallthru
          _
        // Predicated region
        $region21: #{tpu_custom_call.1} parent=11 // pred_check
          %p474 = pneg %p201
        $region22: #{tpu_custom_call.1} parent=11 // pred_check_branch
          %476 = sbr.rel (%p474) target = $region24
        $region23: #{tpu_custom_call.1} parent=11 // pred_region
          _
        $region24: #{tpu_custom_call.1} parent=11 // pred_fallthru
          _
        // Predicated region
        $region25: #{tpu_custom_call.1} parent=11 // pred_check
          %p477 = pneg %p222
        $region26: #{tpu_custom_call.1} parent=11 // pred_check_branch
          %479 = sbr.rel (%p477) target = $region28
        $region27: #{tpu_custom_call.1} parent=11 // pred_region
          _
        $region28: #{tpu_custom_call.1} parent=11 // pred_fallthru
          _
        // Predicated region
        $region29: #{tpu_custom_call.1} parent=11 // pred_check
          %p480 = pneg %p243
        $region30: #{tpu_custom_call.1} parent=11 // pred_check_branch
          %482 = sbr.rel (%p480) target = $region32
        $region31: #{tpu_custom_call.1} parent=11 // pred_region
          _
        $region32: #{tpu_custom_call.1} parent=11 // pred_fallthru
          _
        // Predicated region
        $region33: #{tpu_custom_call.1} parent=11 // pred_check
          %p483 = pneg %p264
        $region34: #{tpu_custom_call.1} parent=11 // pred_check_branch
          %485 = sbr.rel (%p483) target = $region36
        $region35: #{tpu_custom_call.1} parent=11 // pred_region
          _
        $region36: #{tpu_custom_call.1} parent=11 // pred_fallthru
          _
        // Predicated region
        $region37: #{tpu_custom_call.1} parent=11 // pred_check
          %p486 = pneg %p285
        $region38: #{tpu_custom_call.1} parent=11 // pred_check_branch
          %488 = sbr.rel (%p486) target = $region40
        $region39: #{tpu_custom_call.1} parent=11 // pred_region
          %s490 = ssub.s32 1024, 1024
          %491 = vsyncadd [#allocation7], %s490
          %s492 = sshll.u32 [#allocation8], 4
          %s493 = int_to_ptr.vmem [resolvable:$true] %s492
          %498 = dma.hbm_to_vmem [thread:$0]  %s10, 1024, %s493, [#allocation7], 64, 64, 4
        $region40: #{tpu_custom_call.1} parent=11 // pred_fallthru
          _
        // Predicated region
        $region41: #{tpu_custom_call.1} parent=11 // pred_check
          %p499 = pneg %p306
        $region42: #{tpu_custom_call.1} parent=11 // pred_check_branch
          %501 = sbr.rel (%p499) target = $region44
        $region43: #{tpu_custom_call.1} parent=11 // pred_region
          _
        $region44: #{tpu_custom_call.1} parent=11 // pred_fallthru
          _
        // Predicated region
        $region45: #{tpu_custom_call.1} parent=11 // pred_check
          %p502 = pneg %p327
        $region46: #{tpu_custom_call.1} parent=11 // pred_check_branch
          %504 = sbr.rel (%p502) target = $region48
        $region47: #{tpu_custom_call.1} parent=11 // pred_region
          _
        $region48: #{tpu_custom_call.1} parent=11 // pred_fallthru
          _
        // Predicated region
        $region49: #{tpu_custom_call.1} parent=11 // pred_check
          %p505 = pneg %p348
        $region50: #{tpu_custom_call.1} parent=11 // pred_check_branch
          %507 = sbr.rel (%p505) target = $region52
        $region51: #{tpu_custom_call.1} parent=11 // pred_region
          _
        $region52: #{tpu_custom_call.1} parent=11 // pred_fallthru
          _
        // Predicated region
        $region53: #{tpu_custom_call.1} parent=11 // pred_check
          %p508 = pneg %p369
        $region54: #{tpu_custom_call.1} parent=11 // pred_check_branch
          %510 = sbr.rel (%p508) target = $region56
        $region55: #{tpu_custom_call.1} parent=11 // pred_region
          %s512 = ssub.s32 2048, 2048
          %513 = vsyncadd [#allocation10], %s512
          %s514 = sshll.u32 [#allocation9], 4
          %s515 = int_to_ptr.vmem [resolvable:$true] %s514
          %520 = dma.hbm_to_vmem [thread:$0]  %s14, 2048, %s515, [#allocation10], 128, 128, 8
        $region56: #{tpu_custom_call.1} parent=11 // pred_fallthru
          _
        // Predicated region
        $region57: #{tpu_custom_call.1} parent=11 // pred_check
          %p521 = pneg %p390
        $region58: #{tpu_custom_call.1} parent=11 // pred_check_branch
          %523 = sbr.rel (%p521) target = $region60
        $region59: #{tpu_custom_call.1} parent=11 // pred_region
          _
        $region60: #{tpu_custom_call.1} parent=11 // pred_fallthru
          _
      $region12: #{tpu_custom_call.1} parent=5 // pred_fallthru
        _
      %p524 = scmp.lt.s32.totalorder %s34, 3
      // Predicated region
      $region61: #{tpu_custom_call.1} parent=5 // pred_check
        %p525 = pneg %p524
      $region62: #{tpu_custom_call.1} parent=5 // pred_check_branch
        %527 = sbr.rel (%p525) target = $region64
      $region63: #{tpu_custom_call.1} parent=5 // pred_region
        // Predicated region
        $region65: #{tpu_custom_call.1} parent=63 // pred_check
          %p528 = pneg %p54
        $region66: #{tpu_custom_call.1} parent=63 // pred_check_branch
          %530 = sbr.rel (%p528) target = $region68
        $region67: #{tpu_custom_call.1} parent=63 // pred_region
          %s531 = sand.u32 %s44, 1
          %s532 = scalar_lea.sflag [#allocation4], %s531
          %s533 = sand.u32 %s44, 1
          %s534 = smul.addr %s533, 16
          %s535 = scalar_lea.vmem [#allocation3], %s534
          %s537 = ssub.s32 256, 256
          %538 = vsyncadd %s532, %s537
          %s539 = smul.addr %s34, 128
          %s540 = scalar_lea.hbm %s0, %s539
          %s541 = sshll.u32 %s535, 4
          %s542 = int_to_ptr.vmem [resolvable:$true] %s541
          %547 = dma.hbm_to_vmem [thread:$0]  %s540, 256, %s542, %s532, 384, 128, 8
        $region68: #{tpu_custom_call.1} parent=63 // pred_fallthru
          _
        // Predicated region
        $region69: #{tpu_custom_call.1} parent=63 // pred_check
          %p548 = pneg %p80
        $region70: #{tpu_custom_call.1} parent=63 // pred_check_branch
          %550 = sbr.rel (%p548) target = $region72
        $region71: #{tpu_custom_call.1} parent=63 // pred_region
          %p551 = scmp.lt.s32.totalorder %s34, 2
          %s552 = scalar_select %p551, %s34, 2
          %s553 = scalar_lea.vmem %s1, %s552
        $region72: #{tpu_custom_call.1} parent=63 // pred_fallthru
          _
        // Predicated region
        $region73: #{tpu_custom_call.1} parent=63 // pred_check
          %p554 = pneg %p106
        $region74: #{tpu_custom_call.1} parent=63 // pred_check_branch
          %556 = sbr.rel (%p554) target = $region76
        $region75: #{tpu_custom_call.1} parent=63 // pred_region
          %p557 = scmp.lt.s32.totalorder %s34, 2
          %s558 = scalar_select %p557, %s34, 2
          %s559 = scalar_lea.vmem %s2, %s558
        $region76: #{tpu_custom_call.1} parent=63 // pred_fallthru
          _
        // Predicated region
        $region77: #{tpu_custom_call.1} parent=63 // pred_check
          %p560 = pneg %p132
        $region78: #{tpu_custom_call.1} parent=63 // pred_check_branch
          %562 = sbr.rel (%p560) target = $region80
        $region79: #{tpu_custom_call.1} parent=63 // pred_region
          %s563 = sand.u32 %s34, 1
          %s564 = scalar_lea.sflag [#allocation7], %s563
          %s565 = sand.u32 %s122, 1
          %s566 = smul.addr %s565, 192
          %s567 = scalar_lea.vmem [#allocation6], %s566
          %s568 = smul.u32 16, %s34
          %s570 = ssub.s32 3072, 3072
          %571 = vsyncadd %s564, %s570
          %s572 = smul.addr %s568, 3
          %s573 = smul.addr %s572, 64
          %s574 = scalar_lea.hbm %s3, %s573
          %s575 = sshll.u32 %s567, 4
          %s576 = int_to_ptr.vmem [resolvable:$true] %s575
          %581 = dma.hbm_to_vmem [thread:$0]  %s574, 3072, %s576, %s564, 192, 192, 12
        $region80: #{tpu_custom_call.1} parent=63 // pred_fallthru
          _
      $region64: #{tpu_custom_call.1} parent=5 // pred_fallthru
        _
      %p582 = scmp.le.s32.totalorder 1, %s34
      %p583 = scmp.lt.s32.totalorder %s34, 4
      %p584 = pnand %p582, %p583
      %p585 = pneg %p584
      // Predicated region
      $region81: #{tpu_custom_call.1} parent=5 // pred_check
        _
      $region82: #{tpu_custom_call.1} parent=5 // pred_check_branch
        %587 = sbr.rel (%p584) target = $region84
      $region83: #{tpu_custom_call.1} parent=5 // pred_region
        %s588 = ssub.s32 %s34, 1
        %s589 = sand.u32 %s47, 1
        %s590 = scalar_lea.sflag [#allocation4], %s589
        %s591 = sand.u32 %s47, 1
        %s592 = smul.addr %s591, 16
        %s593 = scalar_lea.vmem [#allocation3], %s592
        // Predicated region
        $region85: #{tpu_custom_call.1} parent=83 // pred_check
          %p594 = pneg %p60
        $region86: #{tpu_custom_call.1} parent=83 // pred_check_branch
          %596 = sbr.rel (%p594) target = $region88
        $region87: #{tpu_custom_call.1} parent=83 // pred_region
          %597 = dma.done %s590, 256
        $region88: #{tpu_custom_call.1} parent=83 // pred_fallthru
          _
        %s598 = sand.u32 %s39, 1
        %s599 = scalar_lea.sflag [#allocation7], %s598
        %s600 = sand.u32 %s125, 1
        %s601 = smul.addr %s600, 192
        %s602 = scalar_lea.vmem [#allocation6], %s601
        // Predicated region
        $region89: #{tpu_custom_call.1} parent=83 // pred_check
          %p603 = pneg %p138
        $region90: #{tpu_custom_call.1} parent=83 // pred_check_branch
          %605 = sbr.rel (%p603) target = $region92
        $region91: #{tpu_custom_call.1} parent=83 // pred_region
          %606 = dma.done %s599, 3072
        $region92: #{tpu_custom_call.1} parent=83 // pred_fallthru
          _
        // Predicated region
        $region93: #{tpu_custom_call.1} parent=83 // pred_check
          %p607 = pneg %p285
        $region94: #{tpu_custom_call.1} parent=83 // pred_check_branch
          %609 = sbr.rel (%p607) target = $region96
        $region95: #{tpu_custom_call.1} parent=83 // pred_region
          %610 = dma.done [#allocation7], 1024
        $region96: #{tpu_custom_call.1} parent=83 // pred_fallthru
          _
        // Predicated region
        $region97: #{tpu_custom_call.1} parent=83 // pred_check
          %p611 = pneg %p369
        $region98: #{tpu_custom_call.1} parent=83 // pred_check_branch
          %613 = sbr.rel (%p611) target = $region100
        $region99: #{tpu_custom_call.1} parent=83 // pred_region
          %614 = dma.done [#allocation10], 2048
        $region100: #{tpu_custom_call.1} parent=83 // pred_fallthru
          _
        %s615 = sand.u32 %s47, 1
        %s616 = scalar_lea.sflag [#allocation4], %s615
        %s617 = sand.u32 %s47, 1
        %s618 = smul.addr %s617, 16
        %s619 = scalar_lea.vmem [#allocation3], %s618
        %p620 = pneg %p60
        %p621 = pneg %p57
        %p622 = scmp.lt.s32.totalorder %s39, 2
        %s623 = scalar_select %p622, %s39, 2
        %s624 = scalar_lea.vmem %s1, %s623
        %p625 = pneg %p86
        %p626 = pneg %p83
        %p627 = scmp.lt.s32.totalorder %s39, 2
        %s628 = scalar_select %p627, %s39, 2
        %s629 = scalar_lea.vmem %s2, %s628
        %p630 = pneg %p112
        %p631 = pneg %p109
        %s632 = sand.u32 %s39, 1
        %s633 = scalar_lea.sflag [#allocation7], %s632
        %s634 = sand.u32 %s125, 1
        %s635 = smul.addr %s634, 192
        %s636 = scalar_lea.vmem [#allocation6], %s635
        %p637 = pneg %p138
        %p638 = pneg %p135
        %p639 = pneg %p159
        %p640 = pneg %p156
        %p641 = pneg %p180
        %p642 = pneg %p177
        %p643 = pneg %p201
        %p644 = pneg %p198
        %p645 = pneg %p222
        %p646 = pneg %p219
        %p647 = pneg %p243
        %p648 = pneg %p240
        %p649 = pneg %p264
        %p650 = pneg %p261
        %p651 = pneg %p285
        %p652 = pneg %p282
        %p653 = pneg %p306
        %p654 = pneg %p303
        %p655 = pneg %p327
        %p656 = pneg %p324
        %p657 = pneg %p348
        %p658 = pneg %p345
        %p659 = pneg %p369
        %p660 = pneg %p366
        %p661 = pneg %p390
        %p662 = pneg %p387
        %p663 = pneg %p411
        %p664 = pneg %p408
        %p665 = pneg %p432
        %p666 = pneg %p429
        %p667 = pneg %p453
        %p668 = pneg %p450
        %p669 = scmp.lt.s32.totalorder %s39, 2
        %s670 = scalar_select %p669, %s39, 2
        %s671 = scalar_lea.vmem %s1, %s670
        %p672 = scmp.lt.s32.totalorder %s39, 2
        %s673 = scalar_select %p672, %s39, 2
        %s674 = scalar_lea.vmem %s2, %s673
        %s675 = smul.u32 16, %s39
        %p677 = scmp.eq.s32.totalorder %s39, 0
        // Predicated region
        $region101: #{tpu_custom_call.1} parent=83 // pred_check
          %p678 = pneg %p677
        $region102: #{tpu_custom_call.1} parent=83 // pred_check_branch
          %680 = sbr.rel (%p678) target = $region104
        $region103: #{tpu_custom_call.1} parent=83 // pred_region
          %681 = vst [vmem:[#allocation2] sm:$0xff] 0.0
          %682 = vst [vmem:[#allocation2 + $0x8] sm:$0xff] 0.0
          %683 = vst [vmem:[#allocation2 + $0x10] sm:$0xff] 0.0
          %684 = vst [vmem:[#allocation2 + $0x18] sm:$0xff] 0.0
          %685 = vst [vmem:[#allocation2 + $0x20] sm:$0xff] 0.0
          %686 = vst [vmem:[#allocation2 + $0x28] sm:$0xff] 0.0
        $region104: #{tpu_custom_call.1} parent=83 // pred_fallthru
          _
        %v687 = vld [vmem:[%s593] sm:$0xff]
        %v688 = vld [vmem:[%s593 + $0x8] sm:$0xff]
        %v689 = vadd.f32 %v687, %v688
        %v690 = vrot.slane %v689, 4
        %v691 = vadd.f32 %v689, %v690
        %v692 = vrot.slane %v691, 2
        %v693 = vadd.f32 %v691, %v692
        %v694 = vrot.slane %v693, 1
        %v695 = vadd.f32 %v693, %v694
        %v696 = vrcp.pop 16.0
        %v697 = vmul.f32 %v695, %v696
        %v698 = vmul.f32 %v687, %v687
        %v699 = vmul.f32 %v688, %v688
        %v700 = vadd.f32 %v698, %v699
        %v701 = vrot.slane %v700, 4
        %v702 = vadd.f32 %v700, %v701
        %v703 = vrot.slane %v702, 2
        %v704 = vadd.f32 %v702, %v703
        %v705 = vrot.slane %v704, 1
        %v706 = vadd.f32 %v704, %v705
        %v707 = vmul.f32 %v706, %v696
        %v708 = vmul.f32 %v697, %v697
        %v709 = vsub.f32 %v707, %v708
        %v710 = vmax.f32 %v709, 0.0
        %v711 = vsub.f32 %v687, %v697
        %v712 = vsub.f32 %v688, %v697
        %v713 = vadd.f32 %v710, 1e-05
        %v714 = vrsqrt.pop %v713
        %v715 = vmul.f32 %v711, %v714
        %v716 = vmul.f32 %v712, %v714
        %v717 = vld [vmem:[%s671] sm:$0x1]
        %v719 = vlaneseq
        %v720 = vshrl.u32 %v719, 7
        %v721 = vsub.s32 0, %v720
        %v722 = vrot.slane %v717, %v721
        %v724 = vmul.f32 %v715, %v722
        %v725 = vmul.f32 %v716, %v722
        %v726 = vld [vmem:[%s674] sm:$0x1]
        %v728 = vlaneseq
        %v729 = vshrl.u32 %v728, 7
        %v730 = vsub.s32 0, %v729
        %v731 = vrot.slane %v726, %v730
        %v733 = vadd.f32 %v724, %v731
        %v734 = vadd.f32 %v725, %v731
        %v735 = vld [vmem:[#allocation2] sm:$0xff]
        %v736 = vld [vmem:[#allocation2 + $0x8] sm:$0xff]
        %v737 = vld [vmem:[#allocation2 + $0x10] sm:$0xff]
        %v738 = vld [vmem:[#allocation2 + $0x18] sm:$0xff]
        %v739 = vld [vmem:[#allocation2 + $0x20] sm:$0xff]
        %v740 = vld [vmem:[#allocation2 + $0x28] sm:$0xff]
        %v741 = vpack.c.bf16 %v734, %v733
        %v742 = vld [vmem:[%s602] sm:$0xff]
        %v743 = vld [vmem:[%s602 + $0x8] sm:$0xf]
        %v744 = vld [vmem:[%s602 + $0xc] sm:$0xff]
        %v745 = vld [vmem:[%s602 + $0x14] sm:$0xf]
        %v746 = vld [vmem:[%s602 + $0x18] sm:$0xff]
        %v747 = vld [vmem:[%s602 + $0x20] sm:$0xf]
        %v748 = vld [vmem:[%s602 + $0x24] sm:$0xff]
        %v749 = vld [vmem:[%s602 + $0x2c] sm:$0xf]
        %v750 = vld [vmem:[%s602 + $0x30] sm:$0xff]
        %v751 = vld [vmem:[%s602 + $0x38] sm:$0xf]
        %v752 = vld [vmem:[%s602 + $0x3c] sm:$0xff]
        %v753 = vld [vmem:[%s602 + $0x44] sm:$0xf]
        %v754 = vld [vmem:[%s602 + $0x48] sm:$0xff]
        %v755 = vld [vmem:[%s602 + $0x50] sm:$0xf]
        %v756 = vld [vmem:[%s602 + $0x54] sm:$0xff]
        %v757 = vld [vmem:[%s602 + $0x5c] sm:$0xf]
        %v758 = vld [vmem:[%s602 + $0x60] sm:$0xff]
        %v759 = vld [vmem:[%s602 + $0x68] sm:$0xf]
        %v760 = vld [vmem:[%s602 + $0x6c] sm:$0xff]
        %v761 = vld [vmem:[%s602 + $0x74] sm:$0xf]
        %v762 = vld [vmem:[%s602 + $0x78] sm:$0xff]
        %v763 = vld [vmem:[%s602 + $0x80] sm:$0xf]
        %v764 = vld [vmem:[%s602 + $0x84] sm:$0xff]
        %v765 = vld [vmem:[%s602 + $0x8c] sm:$0xf]
        %v766 = vld [vmem:[%s602 + $0x90] sm:$0xff]
        %v767 = vld [vmem:[%s602 + $0x98] sm:$0xf]
        %v768 = vld [vmem:[%s602 + $0x9c] sm:$0xff]
        %v769 = vld [vmem:[%s602 + $0xa4] sm:$0xf]
        %v770 = vld [vmem:[%s602 + $0xa8] sm:$0xff]
        %v771 = vld [vmem:[%s602 + $0xb0] sm:$0xf]
        %v772 = vld [vmem:[%s602 + $0xb4] sm:$0xff]
        %v773 = vld [vmem:[%s602 + $0xbc] sm:$0xf]
        %v806 = vunpack.c.l.b16 %v742
        %v807 = vunpack.c.h.b16 %v742
        %v808 = vunpack.c.l.b16 %v743
        %v809 = vunpack.c.l.b16 %v744
        %v810 = vunpack.c.h.b16 %v744
        %v811 = vunpack.c.l.b16 %v745
        %v812 = vunpack.c.l.b16 %v746
        %v813 = vunpack.c.h.b16 %v746
        %v814 = vunpack.c.l.b16 %v747
        %v815 = vunpack.c.l.b16 %v748
        %v816 = vunpack.c.h.b16 %v748
        %v817 = vunpack.c.l.b16 %v749
        %v818 = vunpack.c.l.b16 %v750
        %v819 = vunpack.c.h.b16 %v750
        %v820 = vunpack.c.l.b16 %v751
        %v821 = vunpack.c.l.b16 %v752
        %v822 = vunpack.c.h.b16 %v752
        %v823 = vunpack.c.l.b16 %v753
        %v824 = vunpack.c.l.b16 %v754
        %v825 = vunpack.c.h.b16 %v754
        %v826 = vunpack.c.l.b16 %v755
        %v827 = vunpack.c.l.b16 %v756
        %v828 = vunpack.c.h.b16 %v756
        %v829 = vunpack.c.l.b16 %v757
        %v830 = vunpack.c.l.b16 %v758
        %v831 = vunpack.c.h.b16 %v758
        %v832 = vunpack.c.l.b16 %v759
        %v833 = vunpack.c.l.b16 %v760
        %v834 = vunpack.c.h.b16 %v760
        %v835 = vunpack.c.l.b16 %v761
        %v836 = vunpack.c.l.b16 %v762
        %v837 = vunpack.c.h.b16 %v762
        %v838 = vunpack.c.l.b16 %v763
        %v839 = vunpack.c.l.b16 %v764
        %v840 = vunpack.c.h.b16 %v764
        %v841 = vunpack.c.l.b16 %v765
        %v842 = vunpack.c.l.b16 %v766
        %v843 = vunpack.c.h.b16 %v766
        %v844 = vunpack.c.l.b16 %v767
        %v845 = vunpack.c.l.b16 %v768
        %v846 = vunpack.c.h.b16 %v768
        %v847 = vunpack.c.l.b16 %v769
        %v848 = vunpack.c.l.b16 %v770
        %v849 = vunpack.c.h.b16 %v770
        %v850 = vunpack.c.l.b16 %v771
        %v851 = vunpack.c.l.b16 %v772
        %v852 = vunpack.c.h.b16 %v772
        %v853 = vunpack.c.l.b16 %v773
        %v854 = vpack.c.b16 %v809, %v806
        %v855 = vpack.c.b16 %v810, %v807
        %v856 = vpack.c.b16 %v811, %v808
        %v857 = vpack.c.b16 %v815, %v812
        %v858 = vpack.c.b16 %v816, %v813
        %v859 = vpack.c.b16 %v817, %v814
        %v860 = vpack.c.b16 %v821, %v818
        %v861 = vpack.c.b16 %v822, %v819
        %v862 = vpack.c.b16 %v823, %v820
        %v863 = vpack.c.b16 %v827, %v824
        %v864 = vpack.c.b16 %v828, %v825
        %v865 = vpack.c.b16 %v829, %v826
        %v866 = vpack.c.b16 %v833, %v830
        %v867 = vpack.c.b16 %v834, %v831
        %v868 = vpack.c.b16 %v835, %v832
        %v869 = vpack.c.b16 %v839, %v836
        %v870 = vpack.c.b16 %v840, %v837
        %v871 = vpack.c.b16 %v841, %v838
        %v872 = vpack.c.b16 %v845, %v842
        %v873 = vpack.c.b16 %v846, %v843
        %v874 = vpack.c.b16 %v847, %v844
        %v875 = vpack.c.b16 %v851, %v848
        %v876 = vpack.c.b16 %v852, %v849
        %v877 = vpack.c.b16 %v853, %v850
        %902 = vmatprep.subr.bf16.mxu0 %v855
        %903 = vmatpush1.bf16.msra.mxu0 %v854
        %904 = vmatprep.subr.bf16.mxu0 %v858
        %905 = vmatpush1.bf16.msra.mxu0 %v857
        %906 = vmatprep.subr.bf16.mxu0 %v861
        %907 = vmatpush1.bf16.msra.mxu0 %v860
        %908 = vmatprep.subr.bf16.mxu0 %v864
        %909 = vmatpush1.bf16.msra.mxu0 %v863
        %910 = vmatprep.subr.bf16.mxu0 %v867
        %911 = vmatpush1.bf16.msra.mxu0 %v866
        %912 = vmatprep.subr.bf16.mxu0 %v870
        %913 = vmatpush1.bf16.msra.mxu0 %v869
        %914 = vmatprep.subr.bf16.mxu0 %v873
        %915 = vmatpush1.bf16.msra.mxu0 %v872
        %916 = vmatprep.subr.bf16.mxu0 %v876
        %917 = vmatpush1.bf16.msra.mxu0 %v875
        %918 = vmatprep.subr.bf16.mxu0 0
        %919 = vmatpush1.bf16.msra.mxu0 0
        %920 = vmatprep.subr.bf16.mxu0 0
        %921 = vmatpush1.bf16.msra.mxu0 0
        %922 = vmatprep.subr.bf16.mxu0 0
        %923 = vmatpush1.bf16.msra.mxu0 0
        %924 = vmatprep.subr.bf16.mxu0 0
        %925 = vmatpush1.bf16.msra.mxu0 0
        %926 = vmatprep.subr.bf16.mxu0 0
        %927 = vmatpush1.bf16.msra.mxu0 0
        %928 = vmatprep.subr.bf16.mxu0 0
        %929 = vmatpush1.bf16.msra.mxu0 0
        %930 = vmatprep.subr.bf16.mxu0 0
        %931 = vmatpush1.bf16.msra.mxu0 0
        %932 = vmatprep.subr.bf16.mxu0 0
        %933 = vmatpush1.bf16.msra.mxu0 0
        %934 = vmatprep.mubr.bf16.mxu0 0
        %935 = vmatmul.mubr.bf16.gmra.mrb[0].mxu0 %v741
        %v936 = vpop.f32.mrb[0].mxu0
        %v937 = vadd.f32 0.0, %v936
        %v938 = vpop.f32.mrb[0].mxu0
        %v939 = vadd.f32 0.0, %v938
        %v940 = vpop.f32.mrb[0].mxu0
        %v941 = vadd.f32 0.0, %v940
        %v942 = vpop.f32.mrb[0].mxu0
        %v943 = vadd.f32 0.0, %v942
        %944 = vdwg.mxu0
        %945 = vmatprep.subr.bf16.mxu0 0
        %946 = vmatpush1.bf16.msra.mxu0 %v856
        %947 = vmatprep.subr.bf16.mxu0 0
        %948 = vmatpush1.bf16.msra.mxu0 %v859
        %949 = vmatprep.subr.bf16.mxu0 0
        %950 = vmatpush1.bf16.msra.mxu0 %v862
        %951 = vmatprep.subr.bf16.mxu0 0
        %952 = vmatpush1.bf16.msra.mxu0 %v865
        %953 = vmatprep.subr.bf16.mxu0 0
        %954 = vmatpush1.bf16.msra.mxu0 %v868
        %955 = vmatprep.subr.bf16.mxu0 0
        %956 = vmatpush1.bf16.msra.mxu0 %v871
        %957 = vmatprep.subr.bf16.mxu0 0
        %958 = vmatpush1.bf16.msra.mxu0 %v874
        %959 = vmatprep.subr.bf16.mxu0 0
        %960 = vmatpush1.bf16.msra.mxu0 %v877
        %961 = vmatprep.subr.bf16.mxu0 0
        %962 = vmatpush1.bf16.msra.mxu0 0
        %963 = vmatprep.subr.bf16.mxu0 0
        %964 = vmatpush1.bf16.msra.mxu0 0
        %965 = vmatprep.subr.bf16.mxu0 0
        %966 = vmatpush1.bf16.msra.mxu0 0
        %967 = vmatprep.subr.bf16.mxu0 0
        %968 = vmatpush1.bf16.msra.mxu0 0
        %969 = vmatprep.subr.bf16.mxu0 0
        %970 = vmatpush1.bf16.msra.mxu0 0
        %971 = vmatprep.subr.bf16.mxu0 0
        %972 = vmatpush1.bf16.msra.mxu0 0
        %973 = vmatprep.subr.bf16.mxu0 0
        %974 = vmatpush1.bf16.msra.mxu0 0
        %975 = vmatprep.subr.bf16.mxu0 0
        %976 = vmatpush1.bf16.msra.mxu0 0
        %977 = vmatprep.mubr.bf16.mxu0 0
        %978 = vmatmul.mubr.bf16.gmra.mrb[0].mxu0 %v741
        %v979 = vpop.f32.mrb[0].mxu0
        %v980 = vadd.f32 0.0, %v979
        %v981 = vpop.f32.mrb[0].mxu0
        %v982 = vpop.f32.mrb[0].mxu0
        %v983 = vadd.f32 0.0, %v982
        %v984 = vpop.f32.mrb[0].mxu0
        %985 = vdwg.mxu0
        %v986 = vadd.f32 %v735, %v937
        %v987 = vadd.f32 %v736, %v939
        %v988 = vadd.f32 %v737, %v980
        %v989 = vadd.f32 %v738, %v941
        %v990 = vadd.f32 %v739, %v943
        %v991 = vadd.f32 %v740, %v983
        %992 = vst [vmem:[#allocation2] sm:$0xff] %v986
        %993 = vst [vmem:[#allocation2 + $0x8] sm:$0xff] %v987
        %994 = vst [vmem:[#allocation2 + $0x10] sm:$0xff] %v988
        %995 = vst [vmem:[#allocation2 + $0x18] sm:$0xff] %v989
        %996 = vst [vmem:[#allocation2 + $0x20] sm:$0xff] %v990
        %997 = vst [vmem:[#allocation2 + $0x28] sm:$0xff] %v991
        %p998 = scmp.eq.s32.totalorder %s39, 2
        // Predicated region
        $region105: #{tpu_custom_call.1} parent=83 // pred_check
          %p999 = pneg %p998
        $region106: #{tpu_custom_call.1} parent=83 // pred_check_branch
          %1001 = sbr.rel (%p999) target = $region108
        $region107: #{tpu_custom_call.1} parent=83 // pred_region
          %v1002 = vld [vmem:[#allocation2] sm:$0xff]
          %v1003 = vld [vmem:[#allocation2 + $0x8] sm:$0xff]
          %v1004 = vld [vmem:[#allocation2 + $0x10] sm:$0xff]
          %v1005 = vld [vmem:[#allocation2 + $0x18] sm:$0xff]
          %v1006 = vld [vmem:[#allocation2 + $0x20] sm:$0xff]
          %v1007 = vld [vmem:[#allocation2 + $0x28] sm:$0xff]
          %v1008 = vld [vmem:[%s4] sm:$0xff]
          %v1009 = vld [vmem:[%s4 + $0x8] sm:$0xff]
          %v1010 = vld [vmem:[%s5] sm:$0xff]
          %v1011 = vld [vmem:[%s5 + $0x8] sm:$0xff]
          %v1012 = vld [vmem:[%s6] sm:$0x1]
          %v1013 = vld [vmem:[%s7] sm:$0x1]
          %v1014 = vld [vmem:[%s8] sm:$0x1]
          %v1015 = vld [vmem:[%s9] sm:$0x1]
          %v1016 = vld [vmem:[#allocation8] sm:$0xf]
          %v1017 = vld [vmem:[#allocation8 + $0x4] sm:$0xf]
          %v1018 = vld [vmem:[#allocation8 + $0x8] sm:$0xf]
          %v1019 = vld [vmem:[#allocation8 + $0xc] sm:$0xf]
          %v1020 = vld [vmem:[#allocation8 + $0x10] sm:$0xf]
          %v1021 = vld [vmem:[#allocation8 + $0x14] sm:$0xf]
          %v1022 = vld [vmem:[#allocation8 + $0x18] sm:$0xf]
          %v1023 = vld [vmem:[#allocation8 + $0x1c] sm:$0xf]
          %v1024 = vld [vmem:[#allocation8 + $0x20] sm:$0xf]
          %v1025 = vld [vmem:[#allocation8 + $0x24] sm:$0xf]
          %v1026 = vld [vmem:[#allocation8 + $0x28] sm:$0xf]
          %v1027 = vld [vmem:[#allocation8 + $0x2c] sm:$0xf]
          %v1028 = vld [vmem:[#allocation8 + $0x30] sm:$0xf]
          %v1029 = vld [vmem:[#allocation8 + $0x34] sm:$0xf]
          %v1030 = vld [vmem:[#allocation8 + $0x38] sm:$0xf]
          %v1031 = vld [vmem:[#allocation8 + $0x3c] sm:$0xf]
          %v1032 = vld [vmem:[%s11] sm:$0x1]
          %v1033 = vld [vmem:[%s12] sm:$0x1]
          %v1034 = vld [vmem:[%s13] sm:$0x1]
          %v1035 = vld [vmem:[#allocation9] sm:$0xff]
          %v1036 = vld [vmem:[#allocation9 + $0x8] sm:$0xff]
          %v1037 = vld [vmem:[#allocation9 + $0x10] sm:$0xff]
          %v1038 = vld [vmem:[#allocation9 + $0x18] sm:$0xff]
          %v1039 = vld [vmem:[#allocation9 + $0x20] sm:$0xff]
          %v1040 = vld [vmem:[#allocation9 + $0x28] sm:$0xff]
          %v1041 = vld [vmem:[#allocation9 + $0x30] sm:$0xff]
          %v1042 = vld [vmem:[#allocation9 + $0x38] sm:$0xff]
          %v1043 = vld [vmem:[#allocation9 + $0x40] sm:$0xff]
          %v1044 = vld [vmem:[#allocation9 + $0x48] sm:$0xff]
          %v1045 = vld [vmem:[#allocation9 + $0x50] sm:$0xff]
          %v1046 = vld [vmem:[#allocation9 + $0x58] sm:$0xff]
          %v1047 = vld [vmem:[#allocation9 + $0x60] sm:$0xff]
          %v1048 = vld [vmem:[#allocation9 + $0x68] sm:$0xff]
          %v1049 = vld [vmem:[#allocation9 + $0x70] sm:$0xff]
          %v1050 = vld [vmem:[#allocation9 + $0x78] sm:$0xff]
          %v1051 = vld [vmem:[%s15] sm:$0x1]
          %v1053 = vlaneseq
          %v1054 = vshrl.u32 %v1053, 7
          %v1055 = vsub.s32 0, %v1054
          %v1056 = vrot.slane %v1012, %v1055
          %v1058 = vadd.f32 %v1004, %v1056
          %v1059 = vadd.f32 %v1007, %v1056
          %v1061 = vlaneseq
          %v1062 = vshrl.u32 %v1061, 7
          %v1063 = vsub.s32 0, %v1062
          %v1064 = vrot.slane %v1014, %v1063
          %v1066 = vmul.f32 %v1002, %v1064
          %v1067 = vmul.f32 %v1005, %v1064
          %1068 = vadd.xlane.f32.xlu0 %v1066
          %v1069 = vpop.xlane.xlu0 %1068
          %1070 = vadd.xlane.f32.xlu0 %v1067
          %v1071 = vpop.xlane.xlu0 %1070
          %v1073 = vlaneseq
          %v1074 = vshrl.u32 %v1073, 7
          %v1075 = vsub.s32 0, %v1074
          %v1076 = vrot.slane %v1013, %v1075
          %v1078 = vmul.f32 %v1002, %v1076
          %v1079 = vmul.f32 %v1005, %v1076
          %1080 = vadd.xlane.f32.xlu0 %v1078
          %v1081 = vpop.xlane.xlu0 %1080
          %1082 = vadd.xlane.f32.xlu0 %v1079
          %v1083 = vpop.xlane.xlu0 %1082
          %1084 = vxpose.xlu0.b32.start [1/16] %v1081, 128
          %1085 = vxpose.xlu0.b32.cont [2/16] %v1083, 128
          %1086 = vxpose.xlu0.b32.cont [3/16] 0.0, 128
          %1087 = vxpose.xlu0.b32.cont [4/16] 0.0, 128
          %1088 = vxpose.xlu0.b32.cont [5/16] 0.0, 128
          %1089 = vxpose.xlu0.b32.cont [6/16] 0.0, 128
          %1090 = vxpose.xlu0.b32.cont [7/16] 0.0, 128
          %1091 = vxpose.xlu0.b32.cont [8/16] 0.0, 128
          %1092 = vxpose.xlu0.b32.cont [9/16] 0.0, 128
          %1093 = vxpose.xlu0.b32.cont [10/16] 0.0, 128
          %1094 = vxpose.xlu0.b32.cont [11/16] 0.0, 128
          %1095 = vxpose.xlu0.b32.cont [12/16] 0.0, 128
          %1096 = vxpose.xlu0.b32.cont [13/16] 0.0, 128
          %1097 = vxpose.xlu0.b32.cont [14/16] 0.0, 128
          %1098 = vxpose.xlu0.b32.cont [15/16] 0.0, 128
          %1099 = vxpose.xlu0.b32.end [16/16] 0.0, 128
          %v1100 = vpop.trf.xlu0
          %v1101 = vpop.trf.xlu0
          %v1102 = vpop.trf.xlu0
          %v1103 = vpop.trf.xlu0
          %v1104 = vpop.trf.xlu0
          %v1105 = vpop.trf.xlu0
          %v1106 = vpop.trf.xlu0
          %v1107 = vpop.trf.xlu0
          %v1108 = vpop.trf.xlu0
          %v1109 = vpop.trf.xlu0
          %v1110 = vpop.trf.xlu0
          %v1111 = vpop.trf.xlu0
          %v1112 = vpop.trf.xlu0
          %v1113 = vpop.trf.xlu0
          %v1114 = vpop.trf.xlu0
          %v1115 = vpop.trf.xlu0
          %v1116 = vlaneseq
          %v1117 = vshrl.u32 %v1116, 7
          %v1118 = vsub.s32 0, %v1117
          %v1119 = vrot.slane %v1100, %v1118
          %v1120 = vadd.f32 %v1069, %v1119
          %v1121 = vadd.f32 %v1071, %v1119
          %vm1122 = vcmp.ge.f32.partialorder %v1120, 0.0
          %vm1123 = vcmp.ge.f32.partialorder %v1121, 0.0
          %v1124 = vmul.f32 %v1120, 0.2
          %v1125 = vmul.f32 %v1121, 0.2
          %v1126 = vsel %vm1122, %v1120, %v1124
          %v1127 = vsel %vm1123, %v1121, %v1125
          %vm1128 = vcmp.gt.f32.partialorder %v1008, 0.0
          %vm1129 = vcmp.gt.f32.partialorder %v1009, 0.0
          %v1130 = vsel %vm1128, %v1126, -1e+30
          %v1131 = vsel %vm1129, %v1127, -1e+30
          %vm1132 = vcmask 130048
          %v1133 = vsel %vm1132, %v1130, -inf
          %1134 = vmax.xlane.f32.xlu0 %v1133
          %v1135 = vpop.xlane.xlu0 %1134
          %v1136 = vsel %vm1132, %v1131, -inf
          %1137 = vmax.xlane.f32.xlu0 %v1136
          %v1138 = vpop.xlane.xlu0 %1137
          %v1139 = vsub.f32 %v1130, %v1135
          %v1140 = vsub.f32 %v1131, %v1138
          %v1141 = vmul.f32 %v1139, 1.442695
          %v1142 = vpow.pop %v1141
          %v1143 = vmul.f32 %v1140, 1.442695
          %v1144 = vpow.pop %v1143
          %v1145 = vmul.f32 %v1008, %v1142
          %v1146 = vmul.f32 %v1009, %v1144
          %v1147 = vsel %vm1132, %v1145, 0.0
          %1148 = vadd.xlane.f32.xlu0 %v1147
          %v1149 = vpop.xlane.xlu0 %1148
          %v1150 = vsel %vm1132, %v1146, 0.0
          %1151 = vadd.xlane.f32.xlu0 %v1150
          %v1152 = vpop.xlane.xlu0 %1151
          %v1153 = vrcp.pop %v1149
          %v1154 = vmul.f32 %v1145, %v1153
          %v1155 = vrcp.pop %v1152
          %v1156 = vmul.f32 %v1146, %v1155
          %v1158 = vlaneseq
          %v1159 = vshrl.u32 %v1158, 7
          %v1160 = vsub.s32 0, %v1159
          %v1161 = vrot.slane %v1015, %v1160
          %v1164 = vsel %vm1132, %v1154, 0
          %v1167 = vsel %vm1132, %v1156, 0
          %1169 = vmatprep.subr.mxu0 0.0
          %1170 = vmatpush1.msra.mxu0 %v1002
          %1171 = vmatprep.subr.mxu0 0.0
          %1172 = vmatpush1.msra.mxu0 %v1005
          %1173 = vmatprep.subr.mxu0 0.0
          %1174 = vmatpush1.msra.mxu0 0.0
          %1175 = vmatprep.subr.mxu0 0.0
          %1176 = vmatpush1.msra.mxu0 0.0
          %1177 = vmatprep.subr.mxu0 0.0
          %1178 = vmatpush1.msra.mxu0 0.0
          %1179 = vmatprep.subr.mxu0 0.0
          %1180 = vmatpush1.msra.mxu0 0.0
          %1181 = vmatprep.subr.mxu0 0.0
          %1182 = vmatpush1.msra.mxu0 0.0
          %1183 = vmatprep.subr.mxu0 0.0
          %1184 = vmatpush1.msra.mxu0 0.0
          %1185 = vmatprep.subr.mxu0 0.0
          %1186 = vmatpush1.msra.mxu0 0.0
          %1187 = vmatprep.subr.mxu0 0.0
          %1188 = vmatpush1.msra.mxu0 0.0
          %1189 = vmatprep.subr.mxu0 0.0
          %1190 = vmatpush1.msra.mxu0 0.0
          %1191 = vmatprep.subr.mxu0 0.0
          %1192 = vmatpush1.msra.mxu0 0.0
          %1193 = vmatprep.subr.mxu0 0.0
          %1194 = vmatpush1.msra.mxu0 0.0
          %1195 = vmatprep.subr.mxu0 0.0
          %1196 = vmatpush1.msra.mxu0 0.0
          %1197 = vmatprep.subr.mxu0 0.0
          %1198 = vmatpush1.msra.mxu0 0.0
          %1199 = vmatprep.subr.mxu0 0.0
          %1200 = vmatpush1.msra.mxu0 0.0
          %1201 = vmatprep.subr.mxu0 0.0
          %1202 = vmatpush1.msra.mxu0 0.0
          %1203 = vmatprep.subr.mxu0 0.0
          %1204 = vmatpush1.msra.mxu0 0.0
          %1205 = vmatprep.subr.mxu0 0.0
          %1206 = vmatpush1.msra.mxu0 0.0
          %1207 = vmatprep.subr.mxu0 0.0
          %1208 = vmatpush1.msra.mxu0 0.0
          %1209 = vmatprep.subr.mxu0 0.0
          %1210 = vmatpush1.msra.mxu0 0.0
          %1211 = vmatprep.subr.mxu0 0.0
          %1212 = vmatpush1.msra.mxu0 0.0
          %1213 = vmatprep.subr.mxu0 0.0
          %1214 = vmatpush1.msra.mxu0 0.0
          %1215 = vmatprep.subr.mxu0 0.0
          %1216 = vmatpush1.msra.mxu0 0.0
          %1217 = vmatprep.subr.mxu0 0.0
          %1218 = vmatpush1.msra.mxu0 0.0
          %1219 = vmatprep.subr.mxu0 0.0
          %1220 = vmatpush1.msra.mxu0 0.0
          %1221 = vmatprep.subr.mxu0 0.0
          %1222 = vmatpush1.msra.mxu0 0.0
          %1223 = vmatprep.subr.mxu0 0.0
          %1224 = vmatpush1.msra.mxu0 0.0
          %1225 = vmatprep.subr.mxu0 0.0
          %1226 = vmatpush1.msra.mxu0 0.0
          %1227 = vmatprep.subr.mxu0 0.0
          %1228 = vmatpush1.msra.mxu0 0.0
          %1229 = vmatprep.subr.mxu0 0.0
          %1230 = vmatpush1.msra.mxu0 0.0
          %1231 = vmatprep.subr.mxu0 0.0
          %1232 = vmatpush1.msra.mxu0 0.0
          %1233 = vmatprep.mubr.f32.mxu0 0.0
          %1234 = vmatmul.mubr.f32.gmra.mrb[0].mxu0 %v1164
          %v1235 = vpop.f32.mrb[0].mxu0
          %v1236 = vadd.f32 %v1161, %v1235
          %v1237 = vpop.f32.mrb[0].mxu0
          %1238 = vmatprep.mubr.f32.mxu0 0.0
          %1239 = vmatmul.mubr.f32.gmra.mrb[0].mxu0 %v1167
          %v1240 = vpop.f32.mrb[0].mxu0
          %v1241 = vadd.f32 %v1161, %v1240
          %v1242 = vpop.f32.mrb[0].mxu0
          %1243 = vdwg.mxu0
          %v1244 = vpack.c.bf16 %v1241, %v1236
          %v1261 = vunpack.c.l.b16 %v1016
          %v1262 = vunpack.c.l.b16 %v1017
          %v1263 = vunpack.c.l.b16 %v1018
          %v1264 = vunpack.c.l.b16 %v1019
          %v1265 = vunpack.c.l.b16 %v1020
          %v1266 = vunpack.c.l.b16 %v1021
          %v1267 = vunpack.c.l.b16 %v1022
          %v1268 = vunpack.c.l.b16 %v1023
          %v1269 = vunpack.c.l.b16 %v1024
          %v1270 = vunpack.c.l.b16 %v1025
          %v1271 = vunpack.c.l.b16 %v1026
          %v1272 = vunpack.c.l.b16 %v1027
          %v1273 = vunpack.c.l.b16 %v1028
          %v1274 = vunpack.c.l.b16 %v1029
          %v1275 = vunpack.c.l.b16 %v1030
          %v1276 = vunpack.c.l.b16 %v1031
          %v1277 = vpack.c.b16 %v1262, %v1261
          %v1278 = vpack.c.b16 %v1264, %v1263
          %v1279 = vpack.c.b16 %v1266, %v1265
          %v1280 = vpack.c.b16 %v1268, %v1267
          %v1281 = vpack.c.b16 %v1270, %v1269
          %v1282 = vpack.c.b16 %v1272, %v1271
          %v1283 = vpack.c.b16 %v1274, %v1273
          %v1284 = vpack.c.b16 %v1276, %v1275
          %1293 = vmatprep.subr.bf16.mxu0 0
          %1294 = vmatpush1.bf16.msra.mxu0 %v1277
          %1295 = vmatprep.subr.bf16.mxu0 0
          %1296 = vmatpush1.bf16.msra.mxu0 %v1278
          %1297 = vmatprep.subr.bf16.mxu0 0
          %1298 = vmatpush1.bf16.msra.mxu0 %v1279
          %1299 = vmatprep.subr.bf16.mxu0 0
          %1300 = vmatpush1.bf16.msra.mxu0 %v1280
          %1301 = vmatprep.subr.bf16.mxu0 0
          %1302 = vmatpush1.bf16.msra.mxu0 %v1281
          %1303 = vmatprep.subr.bf16.mxu0 0
          %1304 = vmatpush1.bf16.msra.mxu0 %v1282
          %1305 = vmatprep.subr.bf16.mxu0 0
          %1306 = vmatpush1.bf16.msra.mxu0 %v1283
          %1307 = vmatprep.subr.bf16.mxu0 0
          %1308 = vmatpush1.bf16.msra.mxu0 %v1284
          %1309 = vmatprep.subr.bf16.mxu0 0
          %1310 = vmatpush1.bf16.msra.mxu0 0
          %1311 = vmatprep.subr.bf16.mxu0 0
          %1312 = vmatpush1.bf16.msra.mxu0 0
          %1313 = vmatprep.subr.bf16.mxu0 0
          %1314 = vmatpush1.bf16.msra.mxu0 0
          %1315 = vmatprep.subr.bf16.mxu0 0
          %1316 = vmatpush1.bf16.msra.mxu0 0
          %1317 = vmatprep.subr.bf16.mxu0 0
          %1318 = vmatpush1.bf16.msra.mxu0 0
          %1319 = vmatprep.subr.bf16.mxu0 0
          %1320 = vmatpush1.bf16.msra.mxu0 0
          %1321 = vmatprep.subr.bf16.mxu0 0
          %1322 = vmatpush1.bf16.msra.mxu0 0
          %1323 = vmatprep.subr.bf16.mxu0 0
          %1324 = vmatpush1.bf16.msra.mxu0 0
          %1325 = vmatprep.mubr.bf16.mxu0 0
          %1326 = vmatmul.mubr.bf16.gmra.mrb[0].mxu0 %v1244
          %v1327 = vpop.f32.mrb[0].mxu0
          %v1328 = vadd.f32 %v1003, %v1327
          %v1329 = vpop.f32.mrb[0].mxu0
          %v1330 = vpop.f32.mrb[0].mxu0
          %v1331 = vadd.f32 %v1006, %v1330
          %v1332 = vpop.f32.mrb[0].mxu0
          %1333 = vdwg.mxu0
          %v1335 = vlaneseq
          %v1336 = vshrl.u32 %v1335, 7
          %v1337 = vsub.s32 0, %v1336
          %v1338 = vrot.slane %v1033, %v1337
          %v1340 = vmul.f32 %v1328, %v1338
          %v1341 = vmul.f32 %v1331, %v1338
          %1342 = vadd.xlane.f32.xlu0 %v1340
          %v1343 = vpop.xlane.xlu0 %1342
          %1344 = vadd.xlane.f32.xlu0 %v1341
          %v1345 = vpop.xlane.xlu0 %1344
          %v1347 = vlaneseq
          %v1348 = vshrl.u32 %v1347, 7
          %v1349 = vsub.s32 0, %v1348
          %v1350 = vrot.slane %v1032, %v1349
          %v1352 = vmul.f32 %v1328, %v1350
          %v1353 = vmul.f32 %v1331, %v1350
          %1354 = vadd.xlane.f32.xlu0 %v1352
          %v1355 = vpop.xlane.xlu0 %1354
          %1356 = vadd.xlane.f32.xlu0 %v1353
          %v1357 = vpop.xlane.xlu0 %1356
          %1358 = vxpose.xlu0.b32.start [1/16] %v1355, 128
          %1359 = vxpose.xlu0.b32.cont [2/16] %v1357, 128
          %1360 = vxpose.xlu0.b32.cont [3/16] 0.0, 128
          %1361 = vxpose.xlu0.b32.cont [4/16] 0.0, 128
          %1362 = vxpose.xlu0.b32.cont [5/16] 0.0, 128
          %1363 = vxpose.xlu0.b32.cont [6/16] 0.0, 128
          %1364 = vxpose.xlu0.b32.cont [7/16] 0.0, 128
          %1365 = vxpose.xlu0.b32.cont [8/16] 0.0, 128
          %1366 = vxpose.xlu0.b32.cont [9/16] 0.0, 128
          %1367 = vxpose.xlu0.b32.cont [10/16] 0.0, 128
          %1368 = vxpose.xlu0.b32.cont [11/16] 0.0, 128
          %1369 = vxpose.xlu0.b32.cont [12/16] 0.0, 128
          %1370 = vxpose.xlu0.b32.cont [13/16] 0.0, 128
          %1371 = vxpose.xlu0.b32.cont [14/16] 0.0, 128
          %1372 = vxpose.xlu0.b32.cont [15/16] 0.0, 128
          %1373 = vxpose.xlu0.b32.end [16/16] 0.0, 128
          %v1374 = vpop.trf.xlu0
          %v1375 = vpop.trf.xlu0
          %v1376 = vpop.trf.xlu0
          %v1377 = vpop.trf.xlu0
          %v1378 = vpop.trf.xlu0
          %v1379 = vpop.trf.xlu0
          %v1380 = vpop.trf.xlu0
          %v1381 = vpop.trf.xlu0
          %v1382 = vpop.trf.xlu0
          %v1383 = vpop.trf.xlu0
          %v1384 = vpop.trf.xlu0
          %v1385 = vpop.trf.xlu0
          %v1386 = vpop.trf.xlu0
          %v1387 = vpop.trf.xlu0
          %v1388 = vpop.trf.xlu0
          %v1389 = vpop.trf.xlu0
          %v1390 = vlaneseq
          %v1391 = vshrl.u32 %v1390, 7
          %v1392 = vsub.s32 0, %v1391
          %v1393 = vrot.slane %v1374, %v1392
          %v1394 = vadd.f32 %v1343, %v1393
          %v1395 = vadd.f32 %v1345, %v1393
          %vm1396 = vcmp.ge.f32.partialorder %v1394, 0.0
          %vm1397 = vcmp.ge.f32.partialorder %v1395, 0.0
          %v1398 = vmul.f32 %v1394, 0.2
          %v1399 = vmul.f32 %v1395, 0.2
          %v1400 = vsel %vm1396, %v1394, %v1398
          %v1401 = vsel %vm1397, %v1395, %v1399
          %v1402 = vsel %vm1128, %v1400, -1e+30
          %v1403 = vsel %vm1129, %v1401, -1e+30
          %v1404 = vsel %vm1132, %v1402, -inf
          %1405 = vmax.xlane.f32.xlu0 %v1404
          %v1406 = vpop.xlane.xlu0 %1405
          %v1407 = vsel %vm1132, %v1403, -inf
          %1408 = vmax.xlane.f32.xlu0 %v1407
          %v1409 = vpop.xlane.xlu0 %1408
          %v1410 = vsub.f32 %v1402, %v1406
          %v1411 = vsub.f32 %v1403, %v1409
          %v1412 = vmul.f32 %v1410, 1.442695
          %v1413 = vpow.pop %v1412
          %v1414 = vmul.f32 %v1411, 1.442695
          %v1415 = vpow.pop %v1414
          %v1416 = vmul.f32 %v1008, %v1413
          %v1417 = vmul.f32 %v1009, %v1415
          %v1418 = vsel %vm1132, %v1416, 0.0
          %1419 = vadd.xlane.f32.xlu0 %v1418
          %v1420 = vpop.xlane.xlu0 %1419
          %v1421 = vsel %vm1132, %v1417, 0.0
          %1422 = vadd.xlane.f32.xlu0 %v1421
          %v1423 = vpop.xlane.xlu0 %1422
          %v1424 = vrcp.pop %v1420
          %v1425 = vmul.f32 %v1416, %v1424
          %v1426 = vrcp.pop %v1423
          %v1427 = vmul.f32 %v1417, %v1426
          %v1429 = vlaneseq
          %v1430 = vshrl.u32 %v1429, 7
          %v1431 = vsub.s32 0, %v1430
          %v1432 = vrot.slane %v1034, %v1431
          %v1435 = vsel %vm1132, %v1425, 0
          %v1438 = vsel %vm1132, %v1427, 0
          %1440 = vmatprep.subr.mxu0 0.0
          %1441 = vmatpush1.msra.mxu0 %v1328
          %1442 = vmatprep.subr.mxu0 0.0
          %1443 = vmatpush1.msra.mxu0 %v1331
          %1444 = vmatprep.subr.mxu0 0.0
          %1445 = vmatpush1.msra.mxu0 0.0
          %1446 = vmatprep.subr.mxu0 0.0
          %1447 = vmatpush1.msra.mxu0 0.0
          %1448 = vmatprep.subr.mxu0 0.0
          %1449 = vmatpush1.msra.mxu0 0.0
          %1450 = vmatprep.subr.mxu0 0.0
          %1451 = vmatpush1.msra.mxu0 0.0
          %1452 = vmatprep.subr.mxu0 0.0
          %1453 = vmatpush1.msra.mxu0 0.0
          %1454 = vmatprep.subr.mxu0 0.0
          %1455 = vmatpush1.msra.mxu0 0.0
          %1456 = vmatprep.subr.mxu0 0.0
          %1457 = vmatpush1.msra.mxu0 0.0
          %1458 = vmatprep.subr.mxu0 0.0
          %1459 = vmatpush1.msra.mxu0 0.0
          %1460 = vmatprep.subr.mxu0 0.0
          %1461 = vmatpush1.msra.mxu0 0.0
          %1462 = vmatprep.subr.mxu0 0.0
          %1463 = vmatpush1.msra.mxu0 0.0
          %1464 = vmatprep.subr.mxu0 0.0
          %1465 = vmatpush1.msra.mxu0 0.0
          %1466 = vmatprep.subr.mxu0 0.0
          %1467 = vmatpush1.msra.mxu0 0.0
          %1468 = vmatprep.subr.mxu0 0.0
          %1469 = vmatpush1.msra.mxu0 0.0
          %1470 = vmatprep.subr.mxu0 0.0
          %1471 = vmatpush1.msra.mxu0 0.0
          %1472 = vmatprep.subr.mxu0 0.0
          %1473 = vmatpush1.msra.mxu0 0.0
          %1474 = vmatprep.subr.mxu0 0.0
          %1475 = vmatpush1.msra.mxu0 0.0
          %1476 = vmatprep.subr.mxu0 0.0
          %1477 = vmatpush1.msra.mxu0 0.0
          %1478 = vmatprep.subr.mxu0 0.0
          %1479 = vmatpush1.msra.mxu0 0.0
          %1480 = vmatprep.subr.mxu0 0.0
          %1481 = vmatpush1.msra.mxu0 0.0
          %1482 = vmatprep.subr.mxu0 0.0
          %1483 = vmatpush1.msra.mxu0 0.0
          %1484 = vmatprep.subr.mxu0 0.0
          %1485 = vmatpush1.msra.mxu0 0.0
          %1486 = vmatprep.subr.mxu0 0.0
          %1487 = vmatpush1.msra.mxu0 0.0
          %1488 = vmatprep.subr.mxu0 0.0
          %1489 = vmatpush1.msra.mxu0 0.0
          %1490 = vmatprep.subr.mxu0 0.0
          %1491 = vmatpush1.msra.mxu0 0.0
          %1492 = vmatprep.subr.mxu0 0.0
          %1493 = vmatpush1.msra.mxu0 0.0
          %1494 = vmatprep.subr.mxu0 0.0
          %1495 = vmatpush1.msra.mxu0 0.0
          %1496 = vmatprep.subr.mxu0 0.0
          %1497 = vmatpush1.msra.mxu0 0.0
          %1498 = vmatprep.subr.mxu0 0.0
          %1499 = vmatpush1.msra.mxu0 0.0
          %1500 = vmatprep.subr.mxu0 0.0
          %1501 = vmatpush1.msra.mxu0 0.0
          %1502 = vmatprep.subr.mxu0 0.0
          %1503 = vmatpush1.msra.mxu0 0.0
          %1504 = vmatprep.mubr.f32.mxu0 0.0
          %1505 = vmatmul.mubr.f32.gmra.mrb[0].mxu0 %v1435
          %v1506 = vpop.f32.mrb[0].mxu0
          %v1507 = vadd.f32 %v1432, %v1506
          %v1508 = vpop.f32.mrb[0].mxu0
          %1509 = vmatprep.mubr.f32.mxu0 0.0
          %1510 = vmatmul.mubr.f32.gmra.mrb[0].mxu0 %v1438
          %v1511 = vpop.f32.mrb[0].mxu0
          %v1512 = vadd.f32 %v1432, %v1511
          %v1513 = vpop.f32.mrb[0].mxu0
          %1514 = vdwg.mxu0
          %v1516 = vlaneseq
          %v1517 = vshrl.u32 %v1516, 7
          %v1518 = vsub.s32 0, %v1517
          %v1519 = vrot.slane %v1051, %v1518
          %1521 = vmatprep.subr.mxu0 0.0
          %1522 = vmatpush1.msra.mxu0 %v1035
          %1523 = vmatprep.subr.mxu0 0.0
          %1524 = vmatpush1.msra.mxu0 %v1036
          %1525 = vmatprep.subr.mxu0 0.0
          %1526 = vmatpush1.msra.mxu0 %v1037
          %1527 = vmatprep.subr.mxu0 0.0
          %1528 = vmatpush1.msra.mxu0 %v1038
          %1529 = vmatprep.subr.mxu0 0.0
          %1530 = vmatpush1.msra.mxu0 %v1039
          %1531 = vmatprep.subr.mxu0 0.0
          %1532 = vmatpush1.msra.mxu0 %v1040
          %1533 = vmatprep.subr.mxu0 0.0
          %1534 = vmatpush1.msra.mxu0 %v1041
          %1535 = vmatprep.subr.mxu0 0.0
          %1536 = vmatpush1.msra.mxu0 %v1042
          %1537 = vmatprep.subr.mxu0 0.0
          %1538 = vmatpush1.msra.mxu0 %v1043
          %1539 = vmatprep.subr.mxu0 0.0
          %1540 = vmatpush1.msra.mxu0 %v1044
          %1541 = vmatprep.subr.mxu0 0.0
          %1542 = vmatpush1.msra.mxu0 %v1045
          %1543 = vmatprep.subr.mxu0 0.0
          %1544 = vmatpush1.msra.mxu0 %v1046
          %1545 = vmatprep.subr.mxu0 0.0
          %1546 = vmatpush1.msra.mxu0 %v1047
          %1547 = vmatprep.subr.mxu0 0.0
          %1548 = vmatpush1.msra.mxu0 %v1048
          %1549 = vmatprep.subr.mxu0 0.0
          %1550 = vmatpush1.msra.mxu0 %v1049
          %1551 = vmatprep.subr.mxu0 0.0
          %1552 = vmatpush1.msra.mxu0 %v1050
          %1553 = vmatprep.subr.mxu0 0.0
          %1554 = vmatpush1.msra.mxu0 0.0
          %1555 = vmatprep.subr.mxu0 0.0
          %1556 = vmatpush1.msra.mxu0 0.0
          %1557 = vmatprep.subr.mxu0 0.0
          %1558 = vmatpush1.msra.mxu0 0.0
          %1559 = vmatprep.subr.mxu0 0.0
          %1560 = vmatpush1.msra.mxu0 0.0
          %1561 = vmatprep.subr.mxu0 0.0
          %1562 = vmatpush1.msra.mxu0 0.0
          %1563 = vmatprep.subr.mxu0 0.0
          %1564 = vmatpush1.msra.mxu0 0.0
          %1565 = vmatprep.subr.mxu0 0.0
          %1566 = vmatpush1.msra.mxu0 0.0
          %1567 = vmatprep.subr.mxu0 0.0
          %1568 = vmatpush1.msra.mxu0 0.0
          %1569 = vmatprep.subr.mxu0 0.0
          %1570 = vmatpush1.msra.mxu0 0.0
          %1571 = vmatprep.subr.mxu0 0.0
          %1572 = vmatpush1.msra.mxu0 0.0
          %1573 = vmatprep.subr.mxu0 0.0
          %1574 = vmatpush1.msra.mxu0 0.0
          %1575 = vmatprep.subr.mxu0 0.0
          %1576 = vmatpush1.msra.mxu0 0.0
          %1577 = vmatprep.subr.mxu0 0.0
          %1578 = vmatpush1.msra.mxu0 0.0
          %1579 = vmatprep.subr.mxu0 0.0
          %1580 = vmatpush1.msra.mxu0 0.0
          %1581 = vmatprep.subr.mxu0 0.0
          %1582 = vmatpush1.msra.mxu0 0.0
          %1583 = vmatprep.subr.mxu0 0.0
          %1584 = vmatpush1.msra.mxu0 0.0
          %1585 = vmatprep.mubr.f32.mxu0 0.0
          %1586 = vmatmul.mubr.f32.gmra.mrb[0].mxu0 %v1507
          %v1587 = vpop.f32.mrb[0].mxu0
          %v1588 = vadd.f32 %v1519, %v1587
          %v1589 = vpop.f32.mrb[0].mxu0
          %1590 = vmatprep.mubr.f32.mxu0 0.0
          %1591 = vmatmul.mubr.f32.gmra.mrb[0].mxu0 %v1512
          %v1592 = vpop.f32.mrb[0].mxu0
          %v1593 = vadd.f32 %v1519, %v1592
          %v1594 = vpop.f32.mrb[0].mxu0
          %1595 = vdwg.mxu0
          %vm1596 = vcmp.ge.s32.totalorder %v1010, 0
          %vm1597 = vcmp.ge.s32.totalorder %v1011, 0
          %v1598 = vsel %vm1596, 1, 0
          %v1599 = vsel %vm1597, 1, 0
          %v1600 = vcvt.s32.f32 %v1598
          %v1601 = vcvt.s32.f32 %v1599
          %v1602 = vlaneseq
          %v1603 = vand.u32 %v1602, 127
          %1604 = vset.pattern.permute.xlu0 0
          %1605 = vperm.xlu0 %1604, %v1010
          %v1606 = vpop.permute.xlu0 %1605
          %1607 = vset.pattern.permute.xlu0 0
          %1608 = vperm.xlu0 %1607, %v1011
          %v1609 = vpop.permute.xlu0 %1608
          %vm1610 = vcmp.eq.s32.totalorder %v1603, %v1606
          %vm1611 = vcmp.eq.s32.totalorder %v1603, %v1609
          %v1612 = vsel %vm1610, 1, 0
          %v1613 = vsel %vm1611, 1, 0
          %v1614 = vcvt.s32.f32 %v1612
          %v1615 = vcvt.s32.f32 %v1613
          %1616 = vmax.xlane.f32.xlu0 %v1588
          %v1617 = vpop.xlane.xlu0 %1616
          %1618 = vmax.xlane.f32.xlu0 %v1593
          %v1619 = vpop.xlane.xlu0 %1618
          %v1620 = vsub.f32 %v1588, %v1617
          %v1621 = vsub.f32 %v1593, %v1619
          %v1622 = vmul.f32 %v1620, 1.442695
          %v1623 = vpow.pop %v1622
          %v1624 = vmul.f32 %v1621, 1.442695
          %v1625 = vpow.pop %v1624
          %1626 = vadd.xlane.f32.xlu0 %v1623
          %v1627 = vpop.xlane.xlu0 %1626
          %1628 = vadd.xlane.f32.xlu0 %v1625
          %v1629 = vpop.xlane.xlu0 %1628
          %v1630 = vlog2.pop %v1627
          %v1631 = vmul.f32 %v1630, 0.6931472
          %v1632 = vlog2.pop %v1629
          %v1633 = vmul.f32 %v1632, 0.6931472
          %v1634 = vadd.f32 %v1617, %v1631
          %v1635 = vadd.f32 %v1619, %v1633
          %v1636 = vsub.f32 %v1588, %v1634
          %v1637 = vsub.f32 %v1593, %v1635
          %v1638 = vmul.f32 %v1614, %v1636
          %v1639 = vmul.f32 %v1615, %v1637
          %1640 = vadd.xlane.f32.xlu0 %v1638
          %v1641 = vpop.xlane.xlu0 %1640
          %1642 = vadd.xlane.f32.xlu0 %v1639
          %v1643 = vpop.xlane.xlu0 %1642
          %v1644 = vsub.f32 0.0, %v1641
          %v1645 = vsub.f32 0.0, %v1643
          %v1646 = vmul.f32 %v1600, %v1644
          %v1647 = vmul.f32 %v1601, %v1645
          %vm1648 = vcmask 7168
          %v1649 = vsel %vm1648, %v1646, 0.0
          %v1650 = vsel %vm1648, %v1647, 0.0
          %v1651 = vadd.f32 %v1649, %v1650
          %v1652 = vrot.slane %v1651, 4
          %v1653 = vadd.f32 %v1651, %v1652
          %v1654 = vrot.slane %v1653, 2
          %v1655 = vadd.f32 %v1653, %v1654
          %v1656 = vrot.slane %v1655, 1
          %v1657 = vadd.f32 %v1655, %v1656
          %v1658 = vsel %vm1648, %v1600, 0.0
          %v1659 = vsel %vm1648, %v1601, 0.0
          %v1660 = vadd.f32 %v1658, %v1659
          %v1661 = vrot.slane %v1660, 4
          %v1662 = vadd.f32 %v1660, %v1661
          %v1663 = vrot.slane %v1662, 2
          %v1664 = vadd.f32 %v1662, %v1663
          %v1665 = vrot.slane %v1664, 1
          %v1666 = vadd.f32 %v1664, %v1665
          %v1667 = vrcp.pop %v1666
          %v1668 = vmul.f32 %v1657, %v1667
          %1669 = vmax.xlane.f32.xlu0 %v1058
          %v1670 = vpop.xlane.xlu0 %1669
          %1671 = vmax.xlane.f32.xlu0 %v1059
          %v1672 = vpop.xlane.xlu0 %1671
          %v1673 = vsub.f32 %v1058, %v1670
          %v1674 = vsub.f32 %v1059, %v1672
          %v1675 = vmul.f32 %v1673, 1.442695
          %v1676 = vpow.pop %v1675
          %v1677 = vmul.f32 %v1674, 1.442695
          %v1678 = vpow.pop %v1677
          %1679 = vadd.xlane.f32.xlu0 %v1676
          %v1680 = vpop.xlane.xlu0 %1679
          %1681 = vadd.xlane.f32.xlu0 %v1678
          %v1682 = vpop.xlane.xlu0 %1681
          %v1683 = vlog2.pop %v1680
          %v1684 = vmul.f32 %v1683, 0.6931472
          %v1685 = vlog2.pop %v1682
          %v1686 = vmul.f32 %v1685, 0.6931472
          %v1687 = vadd.f32 %v1670, %v1684
          %v1688 = vadd.f32 %v1672, %v1686
          %v1689 = vsub.f32 %v1058, %v1687
          %v1690 = vsub.f32 %v1059, %v1688
          %v1691 = vmul.f32 %v1614, %v1689
          %v1692 = vmul.f32 %v1615, %v1690
          %1693 = vadd.xlane.f32.xlu0 %v1691
          %v1694 = vpop.xlane.xlu0 %1693
          %1695 = vadd.xlane.f32.xlu0 %v1692
          %v1696 = vpop.xlane.xlu0 %1695
          %v1697 = vsub.f32 0.0, %v1694
          %v1698 = vsub.f32 0.0, %v1696
          %v1699 = vmul.f32 %v1600, %v1697
          %v1700 = vmul.f32 %v1601, %v1698
          %v1701 = vsel %vm1648, %v1699, 0.0
          %v1702 = vsel %vm1648, %v1700, 0.0
          %v1703 = vadd.f32 %v1701, %v1702
          %v1704 = vrot.slane %v1703, 4
          %v1705 = vadd.f32 %v1703, %v1704
          %v1706 = vrot.slane %v1705, 2
          %v1707 = vadd.f32 %v1705, %v1706
          %v1708 = vrot.slane %v1707, 1
          %v1709 = vadd.f32 %v1707, %v1708
          %v1710 = vmul.f32 %v1709, %v1667
          %v1711 = vadd.f32 %v1668, %v1710
          %vm1712 = vcmp.eq.f32.partialorder %v1588, %v1617
          %vm1713 = vcmp.eq.f32.partialorder %v1593, %v1619
          %v1714 = vsel %vm1712, %v1603, 128
          %v1715 = vsel %vm1713, %v1603, 128
          %v1716 = vand.u32 %v1714, 65535
          %v1717 = vshra.s32 %v1714, 16
          %v1718 = vcvt.s32.f32 %v1716
          %v1719 = vcvt.s32.f32 %v1717
          %1720 = vmin.xlane.f32.xlu0 %v1719
          %v1721 = vpop.xlane.xlu0 %1720
          %vm1722 = vcmp.eq.f32.partialorder %v1719, %v1721
          %v1723 = vsel %vm1722, %v1718, inf
          %1724 = vmin.xlane.f32.xlu0 %v1723
          %v1725 = vpop.xlane.xlu0 %1724
          %v1726 = vcvt.f32.s32 %v1725
          %v1727 = vcvt.f32.s32 %v1721
          %v1728 = vshll.u32 %v1727, 16
          %v1729 = vadd.s32 %v1728, %v1726
          %v1730 = vand.u32 %v1715, 65535
          %v1731 = vshra.s32 %v1715, 16
          %v1732 = vcvt.s32.f32 %v1730
          %v1733 = vcvt.s32.f32 %v1731
          %1734 = vmin.xlane.f32.xlu0 %v1733
          %v1735 = vpop.xlane.xlu0 %1734
          %vm1736 = vcmp.eq.f32.partialorder %v1733, %v1735
          %v1737 = vsel %vm1736, %v1732, inf
          %1738 = vmin.xlane.f32.xlu0 %v1737
          %v1739 = vpop.xlane.xlu0 %1738
          %v1740 = vcvt.f32.s32 %v1739
          %v1741 = vcvt.f32.s32 %v1735
          %v1742 = vshll.u32 %v1741, 16
          %v1743 = vadd.s32 %v1742, %v1740
          %vm1744 = vcmp.eq.s32.totalorder %v1729, %v1010
          %vm1745 = vcmp.eq.s32.totalorder %v1743, %v1011
          %v1746 = vsel %vm1744, 1, 0
          %v1747 = vsel %vm1745, 1, 0
          %v1748 = vcvt.s32.f32 %v1746
          %v1749 = vcvt.s32.f32 %v1747
          %v1750 = vmul.f32 %v1748, %v1600
          %v1751 = vmul.f32 %v1749, %v1601
          %v1752 = vsel %vm1648, %v1750, 0.0
          %v1753 = vsel %vm1648, %v1751, 0.0
          %v1754 = vadd.f32 %v1752, %v1753
          %v1755 = vrot.slane %v1754, 4
          %v1756 = vadd.f32 %v1754, %v1755
          %v1757 = vrot.slane %v1756, 2
          %v1758 = vadd.f32 %v1756, %v1757
          %v1759 = vrot.slane %v1758, 1
          %v1760 = vadd.f32 %v1758, %v1759
          %v1761 = vmul.f32 %v1760, %v1667
          %1762 = vst [vmem:[#allocation11] sm:$0xff] %v1507
          %1763 = vst [vmem:[#allocation11 + $0x8] sm:$0xff] %v1512
          %1764 = vst [vmem:[#allocation12] sm:$0xff] %v1588
          %1765 = vst [vmem:[#allocation12 + $0x8] sm:$0xff] %v1593
          %vm1766 = vcmp.eq.s32.totalorder %v1603, 0
          %vm1767 = vcmp.eq.s32.totalorder %v1603, 1
          %1769 = vset.pattern.permute.xlu0 0
          %1770 = vperm.xlu0 %1769, %v1761
          %v1771 = vpop.permute.xlu0 %1770
          %v1773 = vsel %vm1767, %v1771, 0.0
          %1775 = vset.pattern.permute.xlu0 0
          %1776 = vperm.xlu0 %1775, %v1711
          %v1777 = vpop.permute.xlu0 %1776
          %v1779 = vsel %vm1766, %v1777, %v1773
          %1780 = vst [vmem:[#allocation14] sm:$0x1] %v1779
        $region108: #{tpu_custom_call.1} parent=83 // pred_fallthru
          _
        // Predicated region
        $region109: #{tpu_custom_call.1} parent=83 // pred_check
          %p1781 = pneg %p408
        $region110: #{tpu_custom_call.1} parent=83 // pred_check_branch
          %1783 = sbr.rel (%p1781) target = $region112
        $region111: #{tpu_custom_call.1} parent=83 // pred_region
          %s1785 = ssub.s32 256, 256
          %1786 = vsyncadd [#allocation5], %s1785
          %s1787 = sshll.u32 [#allocation11], 4
          %s1788 = int_to_ptr.vmem [resolvable:$true] %s1787
          %1793 = dma.vmem_to_hbm [thread:$0]  %s1788, 256, %s16, [#allocation5], 128, 128, 8
        $region112: #{tpu_custom_call.1} parent=83 // pred_fallthru
          _
        // Predicated region
        $region113: #{tpu_custom_call.1} parent=83 // pred_check
          %p1794 = pneg %p429
        $region114: #{tpu_custom_call.1} parent=83 // pred_check_branch
          %1796 = sbr.rel (%p1794) target = $region116
        $region115: #{tpu_custom_call.1} parent=83 // pred_region
          %s1798 = ssub.s32 256, 256
          %1799 = vsyncadd [#allocation13], %s1798
          %s1800 = sshll.u32 [#allocation12], 4
          %s1801 = int_to_ptr.vmem [resolvable:$true] %s1800
          %1806 = dma.vmem_to_hbm [thread:$0]  %s1801, 256, %s17, [#allocation13], 128, 128, 8
        $region116: #{tpu_custom_call.1} parent=83 // pred_fallthru
          _
        // Predicated region
        $region117: #{tpu_custom_call.1} parent=83 // pred_check
          %p1807 = pneg %p450
        $region118: #{tpu_custom_call.1} parent=83 // pred_check_branch
          %1809 = sbr.rel (%p1807) target = $region120
        $region119: #{tpu_custom_call.1} parent=83 // pred_region
          %s1811 = ssub.s32 16, 16
          %1812 = vsyncadd [#allocation13], %s1811
          %s1814 = sshll.u32 [#allocation14], 4
          %s1815 = int_to_ptr.vmem [resolvable:$true] %s1814
          %1817 = dma.vmem_to_hbm [thread:$0]  %s1815, 16, %s18, [#allocation13]
        $region120: #{tpu_custom_call.1} parent=83 // pred_fallthru
          _
        // Predicated region
        $region121: #{tpu_custom_call.1} parent=83 // pred_check
          %p1818 = pneg %p408
        $region122: #{tpu_custom_call.1} parent=83 // pred_check_branch
          %1820 = sbr.rel (%p1818) target = $region124
        $region123: #{tpu_custom_call.1} parent=83 // pred_region
          %1821 = dma.done [#allocation5], 256
        $region124: #{tpu_custom_call.1} parent=83 // pred_fallthru
          _
        // Predicated region
        $region125: #{tpu_custom_call.1} parent=83 // pred_check
          %p1822 = pneg %p429
        $region126: #{tpu_custom_call.1} parent=83 // pred_check_branch
          %1824 = sbr.rel (%p1822) target = $region128
        $region127: #{tpu_custom_call.1} parent=83 // pred_region
          %1825 = dma.done [#allocation13], 256
        $region128: #{tpu_custom_call.1} parent=83 // pred_fallthru
          _
        // Predicated region
        $region129: #{tpu_custom_call.1} parent=83 // pred_check
          %p1826 = pneg %p450
        $region130: #{tpu_custom_call.1} parent=83 // pred_check_branch
          %1828 = sbr.rel (%p1826) target = $region132
        $region131: #{tpu_custom_call.1} parent=83 // pred_region
          %1829 = dma.done [#allocation13], 16
        $region132: #{tpu_custom_call.1} parent=83 // pred_fallthru
          _
      $region84: #{tpu_custom_call.1} parent=5 // pred_fallthru
        _
      %p1830 = scmp.le.s32.totalorder 2, %s34
      // Predicated region
      $region133: #{tpu_custom_call.1} parent=5 // pred_check
        %p1831 = pneg %p1830
      $region134: #{tpu_custom_call.1} parent=5 // pred_check_branch
        %1833 = sbr.rel (%p1831) target = $region136
      $region135: #{tpu_custom_call.1} parent=5 // pred_region
        %s1834 = ssub.s32 %s34, 2
      $region136: #{tpu_custom_call.1} parent=5 // pred_fallthru
        _
    $region6: #{tpu_custom_call.1} parent=1 // loop_footer
      %s38 = sadd.s32 1, %s34
    $region7: #{tpu_custom_call.1} parent=1 // loop_footer_branch
      %33 = sbr.rel target = $region3
    $region8: #{tpu_custom_call.1} parent=1 // loop_exit
      _
    %1835 = vsyncpa [#allocation4], 1
    %s1836 = scalar_lea.sflag [#allocation4], 1
    %1837 = vsyncpa %s1836, 1
    %1838 = vsyncpa [#allocation7], 1
    %s1839 = scalar_lea.sflag [#allocation7], 1
    %1840 = vsyncpa %s1839, 1
    %1841 = vsyncpa [#allocation10], 1
    %1842 = vsyncpa [#allocation5], 1
    %s1843 = scalar_lea.sflag [#allocation5], 1
    %1844 = vsyncpa %s1843, 1
    %1845 = vsyncpa [#allocation13], 1

</llo_original>
